<compile_context>
chip_gen: v5e
topology: v5e:2x2
jax: 0.10.0
libtpu: 0.0.40
codegen_flags: <defaults>
</compile_context>

<pallas_src>
import functools

import jax
import jax.numpy as jnp
from jax.experimental import pallas as pl
from jax.experimental.pallas import tpu as pltpu

# "config" values from the original repo are unspecified; pick small deterministic ones.
NUM_HEADS = 4
NUM_ALL_MACHINE = 2
EMBED = 128          # dim_k == dim_v == 128 in the module
LN_EPS = 1e-5        # PyTorch LayerNorm default

# Row-slab layout (per attention block), one (1, E) row each:
#   0..2  bq1, bk1, bv1      3..5  bq2, bk2, bv2
#   6..7  bf1 (two E-wide halves)   8  bf2
#   9,10  norm1 gamma, beta        11,12  norm2 gamma, beta      13..15  zero pad
_ROWS_PER_BLOCK = 16


def _layer_norm(z, g, b):
    m = jnp.mean(z, axis=-1, keepdims=True)
    v = jnp.mean((z - m) ** 2, axis=-1, keepdims=True)
    return (z - m) * jax.lax.rsqrt(v + LN_EPS) * g + b


# --------------------------------------------------------------------------------------
# Fused kernel.  grid=(2,): step 0 = attention block 1, step 1 = attention block 2 + the
# fc_out head + masked softmax.  The running activation lives in a VMEM scratch that
# persists across grid steps; block 2's weight slab is prefetched while block 1 computes.
# --------------------------------------------------------------------------------------
def actor_kernel(x_ref, w_ref, r_ref, h_ref, o_ref, act_ref, *,
                 n, S, E, num_heads, scale, num_all_machine):
    i = pl.program_id(0)
    M = n * S
    hd = E // num_heads
    f32 = jnp.float32

    @pl.when(i == 0)
    def _():
        # Zero-padded state -> (M, E); padded columns only meet zero weight rows.
        act_ref[...] = x_ref[...].reshape(M, E)

    xin = act_ref[...]                               # (M, E)

    def w(c0, c1):                                   # 128-lane-aligned weight-slab slice
        return w_ref[:, c0:c1]

    def row(j):                                      # one (1, E) bias / gamma / beta row
        return r_ref[j:j + 1, :]

    # ---- two-layer Q/K/V projections; first layer fused into one (M, 3E) matmul ----
    h0 = jnp.dot(xin, w(0, 3 * E), preferred_element_type=f32)            # (M, 3E)
    hq = jnp.maximum(h0[:, 0:E] + row(0), 0.0)
    hk = jnp.maximum(h0[:, E:2 * E] + row(1), 0.0)
    hv = jnp.maximum(h0[:, 2 * E:3 * E] + row(2), 0.0)
    q = jnp.dot(hq, w(3 * E, 4 * E), preferred_element_type=f32) + row(3)
    k = jnp.dot(hk, w(4 * E, 5 * E), preferred_element_type=f32) + row(4)
    v = jnp.dot(hv, w(5 * E, 6 * E), preferred_element_type=f32) + row(5)

    q3 = q.reshape(n, S, E)
    k3 = k.reshape(n, S, E)
    v3 = v.reshape(n, S, E)

    # ---- multi-head attention as ONE stacked batch of (num_heads * n) masked matmuls ----
    # Masking the unused head columns (on the 128-lane feature axis) contributes exact
    # zeros, so full-width contractions equal the per-head-slice computation without any
    # 32-lane sub-slices or transposes.  Stacking the heads into the batch axis gives a
    # single softmax pass instead of a serial per-head chain.
    col = jax.lax.broadcasted_iota(jnp.int32, (1, E), 1)
    qm, vm, kb = [], [], []
    for hh in range(num_heads):                      # static loop, only builds the stack
        mh = ((col >= hh * hd) & (col < (hh + 1) * hd)).astype(f32)       # (1, E)
        qm.append(q3 * mh)
        vm.append(v3 * mh)
        kb.append(k3)
    qm = jnp.concatenate(qm, axis=0)                 # (H*n, S, E)
    vm = jnp.concatenate(vm, axis=0)                 # (H*n, S, E)
    kb = jnp.concatenate(kb, axis=0)                 # (H*n, S, E)

    e = jnp.einsum('bqe,bke->bqk', qm, kb, preferred_element_type=f32) * scale
    e = e - jnp.max(e, axis=-1, keepdims=True)
    pe = jnp.exp(e)
    pe = pe * pl.reciprocal(jnp.sum(pe, axis=-1, keepdims=True), approx=True)
    attn_s = jnp.einsum('bqk,bke->bqe', pe, vm, preferred_element_type=f32)  # (H*n, S, E)

    attn = attn_s[0:n]
    for hh in range(1, num_heads):                   # 3 elementwise adds over disjoint heads
        attn = attn + attn_s[hh * n:(hh + 1) * n]
    attn = attn.reshape(M, E)

    x1 = _layer_norm(attn + q, row(9), row(10))

    # ---- feed forward (wf2 stored as two 128-row halves to keep the slab 128 rows) ----
    f0 = jnp.dot(x1, w(6 * E, 8 * E), preferred_element_type=f32)         # (M, 2E)
    fa = jnp.maximum(f0[:, 0:E] + row(6), 0.0)
    fb = jnp.maximum(f0[:, E:2 * E] + row(7), 0.0)
    ff = (jnp.dot(fa, w(8 * E, 9 * E), preferred_element_type=f32)
          + jnp.dot(fb, w(9 * E, 10 * E), preferred_element_type=f32) + row(8))
    xout = _layer_norm(x1 + ff, row(11), row(12))

    act_ref[...] = xout                              # carry activation to the next block

    # ---- fc_out head + masked softmax: only after the last attention block ----
    @pl.when(i == pl.num_programs(0) - 1)
    def _():
        wo1 = h_ref[0:E, :]                          # (E, E)
        bo1 = h_ref[E:E + 1, :]                      # (1, E)
        wo2 = h_ref[E + 1:E + 2, :]                  # (1, E): Linear(E,1) as a lane reduction
        hf = jnp.maximum(jnp.dot(xout, wo1, preferred_element_type=f32) + bo1, 0.0)
        logits = jnp.sum(hf.reshape(n, S, E) * wo2, axis=-1)              # (n, S)
        # fc_out's final scalar bias bo2 shifts every logit uniformly and the masked
        # positions are overwritten with -1e20, so softmax(logits + bo2) == softmax(logits)
        # exactly; it is intentionally omitted from the kernel.
        pos = jax.lax.broadcasted_iota(jnp.int32, (n, S), 1)
        logits = jnp.where(pos >= S - num_all_machine, f32(-1e20), logits)
        mx = jnp.max(logits, axis=-1, keepdims=True)
        ex = jnp.exp(logits - mx)
        o_ref[...] = ex * pl.reciprocal(jnp.sum(ex, axis=-1, keepdims=True), approx=True)


# --------------------------------------------------------------------------------------
# Host-side packing + pallas_call wrapper
# --------------------------------------------------------------------------------------
def _pack_block(p, E):
    """One SelfAttention block -> ((E, 10E) weight slab, (16, E) row slab)."""
    wqkv1 = jnp.concatenate([p['wq1'], p['wk1'], p['wv1']], axis=1)       # (din, 3E)
    din = wqkv1.shape[0]
    wqkv1 = jnp.pad(wqkv1, ((0, E - din), (0, 0)))                        # zero-pad rows
    slab = jnp.concatenate(
        [wqkv1, p['wq2'], p['wk2'], p['wv2'], p['wf1'],
         p['wf2'][:E, :], p['wf2'][E:, :]], axis=1)                       # (E, 10E)
    rows = jnp.concatenate(
        [p['bq1'], p['bk1'], p['bv1'],
         p['bq2'], p['bk2'], p['bv2'],
         p['bf1'][:, :E], p['bf1'][:, E:],
         p['bf2'],
         p['g1'], p['be1'], p['g2'], p['be2'],
         jnp.zeros((_ROWS_PER_BLOCK - 13, E), jnp.float32)], axis=0)      # (16, E)
    return slab, rows


def _pack_head(head, E):
    """fc_out head -> (E + 8, E) slab: rows [0:E)=wo1, E=bo1, E+1=wo2 row, rest zero."""
    return jnp.concatenate(
        [head['wo1'], head['bo1'], head['wo2'].reshape(1, E),
         jnp.zeros((6, E), jnp.float32)], axis=0)


def actor_forward(state, p1, p2, head, num_all_machine=NUM_ALL_MACHINE,
                  num_heads=NUM_HEADS, weight_dtype=jnp.float32):
    n, S, din = state.shape
    E = p1['wq2'].shape[1]
    assert din <= E and E % 128 == 0 and E % num_heads == 0
    scale = 1.0 / float(E) ** 0.5                    # PyTorch scales by 1/sqrt(embed_size)

    slab_a, rows_a = _pack_block(p1, E)
    slab_b, rows_b = _pack_block(p2, E)
    # weight_dtype=jnp.bfloat16 halves weight HBM traffic (v5e/v6e knob); f32 keeps exact
    # PyTorch numerics.  Biases / norms / activations always stay f32.
    wslab = jnp.stack([slab_a, slab_b]).astype(weight_dtype)              # (2, E, 10E)
    rslab = jnp.stack([rows_a, rows_b])                                   # (2, 16, E)
    head_slab = _pack_head(head, E)                                       # (E + 8, E)
    x_pad = jnp.pad(state.astype(jnp.float32), ((0, 0), (0, 0), (0, E - din)))

    # Advisory cost estimate (kernel is launch/DMA-latency bound at this size).
    M = n * S
    blk_flops = (2 * M * E * 3 * E                   # fused first-layer Q/K/V
                 + 3 * 2 * M * E * E                 # second-layer projections
                 + num_heads * 4 * n * S * S * E     # attention matmuls
                 + 2 * 2 * M * E * 2 * E)            # feed-forward
    flops = 2 * blk_flops + 2 * M * E * E + 2 * M * E
    transcendentals = 2 * num_heads * n * S * S + 4 * M + n * S
    bytes_accessed = int(x_pad.size * 4 + wslab.size * wslab.dtype.itemsize
                         + rslab.size * 4 + head_slab.size * 4 + n * S * 4)
    cost = pl.CostEstimate(flops=int(flops), transcendentals=int(transcendentals),
                           bytes_accessed=bytes_accessed)

    kernel = functools.partial(actor_kernel, n=n, S=S, E=E, num_heads=num_heads,
                               scale=scale, num_all_machine=num_all_machine)
    return pl.pallas_call(
        kernel,
        out_shape=jax.ShapeDtypeStruct((n, S), jnp.float32),
        grid=(2,),                                   # one step per attention block
        in_specs=[
            pl.BlockSpec((n, S, E), lambda i: (0, 0, 0)),          # padded state (step 0)
            pl.BlockSpec((None, E, 10 * E), lambda i: (i, 0, 0)),  # per-block weight slab
            pl.BlockSpec((None, _ROWS_PER_BLOCK, E), lambda i: (i, 0, 0)),  # per-block rows
            pl.BlockSpec((E + 8, E), lambda i: (0, 0)),            # head slab (grid-invariant)
        ],
        out_specs=pl.BlockSpec((n, S), lambda i: (0, 0)),
        scratch_shapes=[pltpu.VMEM((n * S, E), jnp.float32)],      # activation carry
        compiler_params=pltpu.CompilerParams(dimension_semantics=("arbitrary",)),
        cost_estimate=cost,
    )(x_pad, wslab, rslab, head_slab)


# --------------------------------------------------------------------------------------
# Deterministic parameter construction (synthetic init mimicking nn.Linear's U(-1/sqrt(in),..))
# --------------------------------------------------------------------------------------
def init_linear(key, fan_in, fan_out):
    kw, kb = jax.random.split(key)
    bound = 1.0 / (fan_in ** 0.5)
    w = jax.random.uniform(kw, (fan_in, fan_out), jnp.float32, -bound, bound)
    b = jax.random.uniform(kb, (1, fan_out), jnp.float32, -bound, bound)
    return w, b


def init_attention_params(key, din, E):
    ks = jax.random.split(key, 8)
    p = {}
    p['wq1'], p['bq1'] = init_linear(ks[0], din, E)
    p['wq2'], p['bq2'] = init_linear(ks[1], E, E)
    p['wk1'], p['bk1'] = init_linear(ks[2], din, E)
    p['wk2'], p['bk2'] = init_linear(ks[3], E, E)
    p['wv1'], p['bv1'] = init_linear(ks[4], din, E)
    p['wv2'], p['bv2'] = init_linear(ks[5], E, E)
    p['wf1'], p['bf1'] = init_linear(ks[6], E, 2 * E)
    p['wf2'], p['bf2'] = init_linear(ks[7], 2 * E, E)
    p['g1'] = jnp.ones((1, E), jnp.float32)
    p['be1'] = jnp.zeros((1, E), jnp.float32)
    p['g2'] = jnp.ones((1, E), jnp.float32)
    p['be2'] = jnp.zeros((1, E), jnp.float32)
    return p


# --------------------------------------------------------------------------------------
# Pure-JAX reference of the PyTorch forward, for validation.
# --------------------------------------------------------------------------------------
def ref_attention(x, p, num_heads=NUM_HEADS):
    def mlp2(z, w1, b1, w2, b2):
        return jnp.maximum(z @ w1 + b1, 0.0) @ w2 + b2

    q = mlp2(x, p['wq1'], p['bq1'], p['wq2'], p['bq2'])
    k = mlp2(x, p['wk1'], p['bk1'], p['wk2'], p['bk2'])
    v = mlp2(x, p['wv1'], p['bv1'], p['wv2'], p['bv2'])
    n, S, E = q.shape
    hd = E // num_heads
    qh = q.reshape(n, S, num_heads, hd)
    kh = k.reshape(n, S, num_heads, hd)
    vh = v.reshape(n, S, num_heads, hd)
    energy = jnp.einsum('nqhd,nkhd->nhqk', qh, kh) * (1.0 / E ** 0.5)
    a = jax.nn.softmax(energy, axis=3)
    attn = jnp.einsum('nhql,nlhd->nqhd', a, vh).reshape(n, S, E)
    x1 = _layer_norm(attn + q, p['g1'], p['be1'])
    ff = mlp2(x1, p['wf1'], p['bf1'], p['wf2'], p['bf2'])
    return _layer_norm(x1 + ff, p['g2'], p['be2'])


def ref_forward(state, p1, p2, head, mask):
    x = ref_attention(state, p1)
    x = ref_attention(x, p2)
    h = jnp.maximum(x @ head['wo1'] + head['bo1'], 0.0)
    prio = h @ head['wo2'] + head['bo2']       # (n, S, 1)
    dist = jnp.squeeze(prio, axis=-1)          # (n, S)
    dist = jnp.where(mask > 0, -1e20, dist)
    return jax.nn.softmax(dist, axis=-1)       # Categorical probs


if __name__ == "__main__":
    key = jax.random.PRNGKey(0)
    n, S, input_size = 2, 8, 32

    k_state, k_p1, k_p2, k_head = jax.random.split(key, 4)
    state = jax.random.normal(k_state, (n, S, input_size), jnp.float32)

    p1 = init_attention_params(k_p1, input_size, EMBED)
    p2 = init_attention_params(k_p2, EMBED, EMBED)
    kw1, kw2 = jax.random.split(k_head)
    wo1, bo1 = init_linear(kw1, EMBED, EMBED)
    wo2, bo2 = init_linear(kw2, EMBED, 1)
    head = {'wo1': wo1, 'bo1': bo1, 'wo2': wo2, 'bo2': bo2}

    # mask[-1 - i] = 1 for i in range(num_all_machine)  (reference only; kernel builds it)
    mask = jnp.zeros((S,), jnp.float32).at[S - NUM_ALL_MACHINE:].set(1.0)

    probs = actor_forward(state, p1, p2, head)
    probs = jax.block_until_ready(probs)

    ref = ref_forward(state, p1, p2, head, mask)
    assert probs.shape == (n, S)
    # Tolerances relaxed vs. exact-f32 because softmax denominators use the EUP
    # approximate reciprocal (pl.reciprocal(approx=True)).
    assert jnp.allclose(jnp.sum(probs, axis=-1), 1.0, atol=5e-3)
    assert jnp.allclose(probs, ref, rtol=1e-2, atol=2e-3), (probs, ref)

    # TODO(synk): Categorical distribution object / checkpoint save-load are host-side
    # PyTorch constructs; the kernel returns the Categorical probabilities directly.
    print("KERNEL_OK")
</pallas_src>

<mosaic_0001>
module attributes {stable_mosaic.version = 11 : i64} {
  func.func @actor_kernel(%arg0: i32, %arg1: memref<2x8x128xf32, #tpu.memory_space<vmem>>, %arg2: memref<1x128x1280xf32, #tpu.memory_space<vmem>>, %arg3: memref<1x16x128xf32, #tpu.memory_space<vmem>>, %arg4: memref<136x128xf32, #tpu.memory_space<vmem>>, %arg5: memref<2x8xf32, #tpu.memory_space<vmem>>, %arg6: memref<16x128xf32, #tpu.memory_space<vmem>>) attributes {dimension_semantics = [#tpu.dimension_semantics<arbitrary>], iteration_bounds = array<i64: 2>, scalar_prefetch = 0 : i64, scratch_operands = 1 : i64, tpu.core_type = #tpu.core_type<tc>, window_params = [{pipeline_mode = #tpu.pipeline_mode<synchronous>, transform_indices = @transform_0, window_bounds = array<i64: 2, 8, 128>}, {transform_indices = @transform_1, window_bounds = array<i64: 1, 128, 1280>}, {transform_indices = @transform_2, window_bounds = array<i64: 1, 16, 128>}, {pipeline_mode = #tpu.pipeline_mode<synchronous>, transform_indices = @transform_3, window_bounds = array<i64: 136, 128>}, {pipeline_mode = #tpu.pipeline_mode<synchronous>, transform_indices = @transform_4, window_bounds = array<i64: 2, 8>}]} {
    %c0_i32 = arith.constant 0 : i32
    %0 = arith.cmpi eq, %arg0, %c0_i32 : i32
    %1 = arith.extui %0 : i1 to i32
    %c0_i32_0 = arith.constant 0 : i32
    %2 = arith.cmpi ne, %1, %c0_i32_0 : i32
    scf.if %2 {
      %c0_77 = arith.constant 0 : index
      %c0_78 = arith.constant 0 : index
      %c0_79 = arith.constant 0 : index
      %216 = vector.load %arg1[%c0_77, %c0_78, %c0_79] : memref<2x8x128xf32, #tpu.memory_space<vmem>>, vector<2x8x128xf32>
      %217 = vector.shape_cast %216 : vector<2x8x128xf32> to vector<16x128xf32>
      %c0_80 = arith.constant 0 : index
      %c0_81 = arith.constant 0 : index
      %218 = vector.load %arg6[%c0_80, %c0_81] : memref<16x128xf32, #tpu.memory_space<vmem>>, vector<16x128xf32>
      tpu.vector_store %arg6[%c0_80, %c0_81], %217 {strides = array<i32>} : memref<16x128xf32, #tpu.memory_space<vmem>>, vector<16x128xf32>,
    } else {
    }
    %c0 = arith.constant 0 : index
    %c0_1 = arith.constant 0 : index
    %3 = vector.load %arg6[%c0, %c0_1] : memref<16x128xf32, #tpu.memory_space<vmem>>, vector<16x128xf32>
    %c0_2 = arith.constant 0 : index
    %c0_3 = arith.constant 0 : index
    %c0_4 = arith.constant 0 : index
    %4 = vector.load %arg2[%c0_2, %c0_3, %c0_4] : memref<1x128x1280xf32, #tpu.memory_space<vmem>>, vector<1x128x384xf32>
    %5 = vector.shape_cast %4 : vector<1x128x384xf32> to vector<128x384xf32>
    %cst = arith.constant dense<0.000000e+00> : vector<16x384xf32>
    %6 = tpu.matmul %3, %5, %cst {dimension_numbers = #tpu.dot_dimension_numbers<[1], [0], [0], [1], [0, 0, 1, 1], [], []>} : vector<16x128xf32>, vector<128x384xf32>, vector<16x384xf32> -> vector<16x384xf32>
    %7 = vector.extract_strided_slice %6 {offsets = [0, 0], sizes = [16, 128], strides = [1, 1]} : vector<16x384xf32> to vector<16x128xf32>
    %c0_5 = arith.constant 0 : index
    %c0_6 = arith.constant 0 : index
    %c0_7 = arith.constant 0 : index
    %8 = vector.load %arg3[%c0_5, %c0_6, %c0_7] : memref<1x16x128xf32, #tpu.memory_space<vmem>>, vector<1x1x128xf32>
    %9 = vector.shape_cast %8 : vector<1x1x128xf32> to vector<1x128xf32>
    %10 = vector.broadcast %9 : vector<1x128xf32> to vector<16x128xf32>
    %11 = arith.addf %7, %10 : vector<16x128xf32>
    %cst_8 = arith.constant 0.000000e+00 : f32
    %12 = vector.broadcast %cst_8 : f32 to vector<16x128xf32>
    %13 = arith.maximumf %11, %12 : vector<16x128xf32>
    %14 = vector.extract_strided_slice %6 {offsets = [0, 128], sizes = [16, 128], strides = [1, 1]} : vector<16x384xf32> to vector<16x128xf32>
    %c0_9 = arith.constant 0 : index
    %c1 = arith.constant 1 : index
    %c0_10 = arith.constant 0 : index
    %15 = vector.load %arg3[%c0_9, %c1, %c0_10] : memref<1x16x128xf32, #tpu.memory_space<vmem>>, vector<1x1x128xf32>
    %16 = vector.shape_cast %15 : vector<1x1x128xf32> to vector<1x128xf32>
    %17 = vector.broadcast %16 : vector<1x128xf32> to vector<16x128xf32>
    %18 = arith.addf %14, %17 : vector<16x128xf32>
    %cst_11 = arith.constant 0.000000e+00 : f32
    %19 = vector.broadcast %cst_11 : f32 to vector<16x128xf32>
    %20 = arith.maximumf %18, %19 : vector<16x128xf32>
    %21 = vector.extract_strided_slice %6 {offsets = [0, 256], sizes = [16, 128], strides = [1, 1]} : vector<16x384xf32> to vector<16x128xf32>
    %c0_12 = arith.constant 0 : index
    %c2 = arith.constant 2 : index
    %c0_13 = arith.constant 0 : index
    %22 = vector.load %arg3[%c0_12, %c2, %c0_13] : memref<1x16x128xf32, #tpu.memory_space<vmem>>, vector<1x1x128xf32>
    %23 = vector.shape_cast %22 : vector<1x1x128xf32> to vector<1x128xf32>
    %24 = vector.broadcast %23 : vector<1x128xf32> to vector<16x128xf32>
    %25 = arith.addf %21, %24 : vector<16x128xf32>
    %cst_14 = arith.constant 0.000000e+00 : f32
    %26 = vector.broadcast %cst_14 : f32 to vector<16x128xf32>
    %27 = arith.maximumf %25, %26 : vector<16x128xf32>
    %c0_15 = arith.constant 0 : index
    %c0_16 = arith.constant 0 : index
    %c384 = arith.constant 384 : index
    %28 = vector.load %arg2[%c0_15, %c0_16, %c384] : memref<1x128x1280xf32, #tpu.memory_space<vmem>>, vector<1x128x128xf32>
    %29 = vector.shape_cast %28 : vector<1x128x128xf32> to vector<128x128xf32>
    %cst_17 = arith.constant dense<0.000000e+00> : vector<16x128xf32>
    %30 = tpu.matmul %13, %29, %cst_17 {dimension_numbers = #tpu.dot_dimension_numbers<[1], [0], [0], [1], [0, 0, 1, 1], [], []>} : vector<16x128xf32>, vector<128x128xf32>, vector<16x128xf32> -> vector<16x128xf32>
    %c0_18 = arith.constant 0 : index
    %c3 = arith.constant 3 : index
    %c0_19 = arith.constant 0 : index
    %31 = vector.load %arg3[%c0_18, %c3, %c0_19] : memref<1x16x128xf32, #tpu.memory_space<vmem>>, vector<1x1x128xf32>
    %32 = vector.shape_cast %31 : vector<1x1x128xf32> to vector<1x128xf32>
    %33 = vector.broadcast %32 : vector<1x128xf32> to vector<16x128xf32>
    %34 = arith.addf %30, %33 : vector<16x128xf32>
    %c0_20 = arith.constant 0 : index
    %c0_21 = arith.constant 0 : index
    %c512 = arith.constant 512 : index
    %35 = vector.load %arg2[%c0_20, %c0_21, %c512] : memref<1x128x1280xf32, #tpu.memory_space<vmem>>, vector<1x128x128xf32>
    %36 = vector.shape_cast %35 : vector<1x128x128xf32> to vector<128x128xf32>
    %cst_22 = arith.constant dense<0.000000e+00> : vector<16x128xf32>
    %37 = tpu.matmul %20, %36, %cst_22 {dimension_numbers = #tpu.dot_dimension_numbers<[1], [0], [0], [1], [0, 0, 1, 1], [], []>} : vector<16x128xf32>, vector<128x128xf32>, vector<16x128xf32> -> vector<16x128xf32>
    %c0_23 = arith.constant 0 : index
    %c4 = arith.constant 4 : index
    %c0_24 = arith.constant 0 : index
    %38 = vector.load %arg3[%c0_23, %c4, %c0_24] : memref<1x16x128xf32, #tpu.memory_space<vmem>>, vector<1x1x128xf32>
    %39 = vector.shape_cast %38 : vector<1x1x128xf32> to vector<1x128xf32>
    %40 = vector.broadcast %39 : vector<1x128xf32> to vector<16x128xf32>
    %41 = arith.addf %37, %40 : vector<16x128xf32>
    %c0_25 = arith.constant 0 : index
    %c0_26 = arith.constant 0 : index
    %c640 = arith.constant 640 : index
    %42 = vector.load %arg2[%c0_25, %c0_26, %c640] : memref<1x128x1280xf32, #tpu.memory_space<vmem>>, vector<1x128x128xf32>
    %43 = vector.shape_cast %42 : vector<1x128x128xf32> to vector<128x128xf32>
    %cst_27 = arith.constant dense<0.000000e+00> : vector<16x128xf32>
    %44 = tpu.matmul %27, %43, %cst_27 {dimension_numbers = #tpu.dot_dimension_numbers<[1], [0], [0], [1], [0, 0, 1, 1], [], []>} : vector<16x128xf32>, vector<128x128xf32>, vector<16x128xf32> -> vector<16x128xf32>
    %c0_28 = arith.constant 0 : index
    %c5 = arith.constant 5 : index
    %c0_29 = arith.constant 0 : index
    %45 = vector.load %arg3[%c0_28, %c5, %c0_29] : memref<1x16x128xf32, #tpu.memory_space<vmem>>, vector<1x1x128xf32>
    %46 = vector.shape_cast %45 : vector<1x1x128xf32> to vector<1x128xf32>
    %47 = vector.broadcast %46 : vector<1x128xf32> to vector<16x128xf32>
    %48 = arith.addf %44, %47 : vector<16x128xf32>
    %49 = vector.shape_cast %34 : vector<16x128xf32> to vector<2x8x128xf32>
    %50 = vector.shape_cast %41 : vector<16x128xf32> to vector<2x8x128xf32>
    %51 = vector.shape_cast %48 : vector<16x128xf32> to vector<2x8x128xf32>
    %52 = tpu.iota {dimensions = array<i32: 1>} : vector<1x128xi32>
    %c0_i32_30 = arith.constant 0 : i32
    %53 = vector.broadcast %c0_i32_30 : i32 to vector<1x128xi32>
    %54 = arith.cmpi sge, %52, %53 : vector<1x128xi32>
    %c32_i32 = arith.constant 32 : i32
    %55 = vector.broadcast %c32_i32 : i32 to vector<1x128xi32>
    %56 = arith.cmpi slt, %52, %55 : vector<1x128xi32>
    %57 = arith.andi %54, %56 : vector<1x128xi1>
    %58 = arith.extui %57 : vector<1x128xi1> to vector<1x128xi32>
    %59 = arith.sitofp %58 : vector<1x128xi32> to vector<1x128xf32>
    %60 = vector.shape_cast %59 : vector<1x128xf32> to vector<1x1x128xf32>
    %61 = vector.broadcast %60 : vector<1x1x128xf32> to vector<2x8x128xf32>
    %62 = arith.mulf %49, %61 : vector<2x8x128xf32>
    %63 = vector.shape_cast %59 : vector<1x128xf32> to vector<1x1x128xf32>
    %64 = vector.broadcast %63 : vector<1x1x128xf32> to vector<2x8x128xf32>
    %65 = arith.mulf %51, %64 : vector<2x8x128xf32>
    %c32_i32_31 = arith.constant 32 : i32
    %66 = vector.broadcast %c32_i32_31 : i32 to vector<1x128xi32>
    %67 = arith.cmpi sge, %52, %66 : vector<1x128xi32>
    %c64_i32 = arith.constant 64 : i32
    %68 = vector.broadcast %c64_i32 : i32 to vector<1x128xi32>
    %69 = arith.cmpi slt, %52, %68 : vector<1x128xi32>
    %70 = arith.andi %67, %69 : vector<1x128xi1>
    %71 = arith.extui %70 : vector<1x128xi1> to vector<1x128xi32>
    %72 = arith.sitofp %71 : vector<1x128xi32> to vector<1x128xf32>
    %73 = vector.shape_cast %72 : vector<1x128xf32> to vector<1x1x128xf32>
    %74 = vector.broadcast %73 : vector<1x1x128xf32> to vector<2x8x128xf32>
    %75 = arith.mulf %49, %74 : vector<2x8x128xf32>
    %76 = vector.shape_cast %72 : vector<1x128xf32> to vector<1x1x128xf32>
    %77 = vector.broadcast %76 : vector<1x1x128xf32> to vector<2x8x128xf32>
    %78 = arith.mulf %51, %77 : vector<2x8x128xf32>
    %c64_i32_32 = arith.constant 64 : i32
    %79 = vector.broadcast %c64_i32_32 : i32 to vector<1x128xi32>
    %80 = arith.cmpi sge, %52, %79 : vector<1x128xi32>
    %c96_i32 = arith.constant 96 : i32
    %81 = vector.broadcast %c96_i32 : i32 to vector<1x128xi32>
    %82 = arith.cmpi slt, %52, %81 : vector<1x128xi32>
    %83 = arith.andi %80, %82 : vector<1x128xi1>
    %84 = arith.extui %83 : vector<1x128xi1> to vector<1x128xi32>
    %85 = arith.sitofp %84 : vector<1x128xi32> to vector<1x128xf32>
    %86 = vector.shape_cast %85 : vector<1x128xf32> to vector<1x1x128xf32>
    %87 = vector.broadcast %86 : vector<1x1x128xf32> to vector<2x8x128xf32>
    %88 = arith.mulf %49, %87 : vector<2x8x128xf32>
    %89 = vector.shape_cast %85 : vector<1x128xf32> to vector<1x1x128xf32>
    %90 = vector.broadcast %89 : vector<1x1x128xf32> to vector<2x8x128xf32>
    %91 = arith.mulf %51, %90 : vector<2x8x128xf32>
    %c96_i32_33 = arith.constant 96 : i32
    %92 = vector.broadcast %c96_i32_33 : i32 to vector<1x128xi32>
    %93 = arith.cmpi sge, %52, %92 : vector<1x128xi32>
    %c128_i32 = arith.constant 128 : i32
    %94 = vector.broadcast %c128_i32 : i32 to vector<1x128xi32>
    %95 = arith.cmpi slt, %52, %94 : vector<1x128xi32>
    %96 = arith.andi %93, %95 : vector<1x128xi1>
    %97 = arith.extui %96 : vector<1x128xi1> to vector<1x128xi32>
    %98 = arith.sitofp %97 : vector<1x128xi32> to vector<1x128xf32>
    %99 = vector.shape_cast %98 : vector<1x128xf32> to vector<1x1x128xf32>
    %100 = vector.broadcast %99 : vector<1x1x128xf32> to vector<2x8x128xf32>
    %101 = arith.mulf %49, %100 : vector<2x8x128xf32>
    %102 = vector.shape_cast %98 : vector<1x128xf32> to vector<1x1x128xf32>
    %103 = vector.broadcast %102 : vector<1x1x128xf32> to vector<2x8x128xf32>
    %104 = arith.mulf %51, %103 : vector<2x8x128xf32>
    %105 = tpu.concatenate %62, %75, %88, %101 in 0 : vector<2x8x128xf32>, vector<2x8x128xf32>, vector<2x8x128xf32>, vector<2x8x128xf32> -> vector<8x8x128xf32>
    %106 = tpu.concatenate %65, %78, %91, %104 in 0 : vector<2x8x128xf32>, vector<2x8x128xf32>, vector<2x8x128xf32>, vector<2x8x128xf32> -> vector<8x8x128xf32>
    %107 = tpu.concatenate %50, %50, %50, %50 in 0 : vector<2x8x128xf32>, vector<2x8x128xf32>, vector<2x8x128xf32>, vector<2x8x128xf32> -> vector<8x8x128xf32>
    "tpu.trace_start"() <{level = 10 : i32, message = "bqe,bke->bqk"}> : () -> ()
    %cst_34 = arith.constant dense<0.000000e+00> : vector<8x8x8xf32>
    %108 = tpu.matmul %105, %107, %cst_34 {dimension_numbers = #tpu.dot_dimension_numbers<[2], [2], [1], [1], [0, 0, 0, 1, 1, 1], [0], [0]>} : vector<8x8x128xf32>, vector<8x8x128xf32>, vector<8x8x8xf32> -> vector<8x8x8xf32>
    "tpu.trace_stop"() : () -> ()
    %cst_35 = arith.constant 0.0883883461 : f32
    %109 = vector.broadcast %cst_35 : f32 to vector<8x8x8xf32>
    %110 = arith.mulf %108, %109 : vector<8x8x8xf32>
    %cst_36 = arith.constant dense<0xFF800000> : vector<8x8xf32>
    %111 = vector.multi_reduction <maximumf>, %110, %cst_36 [2] : vector<8x8x8xf32> to vector<8x8xf32>
    %112 = vector.shape_cast %111 : vector<8x8xf32> to vector<8x8x1xf32>
    %113 = vector.broadcast %112 : vector<8x8x1xf32> to vector<8x8x8xf32>
    %114 = arith.subf %110, %113 : vector<8x8x8xf32>
    %115 = math.exp %114 : vector<8x8x8xf32>
    %cst_37 = arith.constant dense<0.000000e+00> : vector<8x8xf32>
    %116 = vector.multi_reduction <add>, %115, %cst_37 [2] : vector<8x8x8xf32> to vector<8x8xf32>
    %117 = vector.shape_cast %116 : vector<8x8xf32> to vector<8x8x1xf32>
    %118 = tpu.reciprocal %117 {approx = true} : vector<8x8x1xf32> -> vector<8x8x1xf32>
    %119 = vector.broadcast %118 : vector<8x8x1xf32> to vector<8x8x8xf32>
    %120 = arith.mulf %115, %119 : vector<8x8x8xf32>
    "tpu.trace_start"() <{level = 10 : i32, message = "bqk,bke->bqe"}> : () -> ()
    %cst_38 = arith.constant dense<0.000000e+00> : vector<8x8x128xf32>
    %121 = tpu.matmul %120, %106, %cst_38 {dimension_numbers = #tpu.dot_dimension_numbers<[2], [1], [1], [2], [0, 0, 0, 1, 1, 2], [0], [0]>} : vector<8x8x8xf32>, vector<8x8x128xf32>, vector<8x8x128xf32> -> vector<8x8x128xf32>
    "tpu.trace_stop"() : () -> ()
    %122 = vector.extract_strided_slice %121 {offsets = [0, 0, 0], sizes = [2, 8, 128], strides = [1, 1, 1]} : vector<8x8x128xf32> to vector<2x8x128xf32>
    %123 = vector.extract_strided_slice %121 {offsets = [2, 0, 0], sizes = [2, 8, 128], strides = [1, 1, 1]} : vector<8x8x128xf32> to vector<2x8x128xf32>
    %124 = arith.addf %122, %123 : vector<2x8x128xf32>
    %125 = vector.extract_strided_slice %121 {offsets = [4, 0, 0], sizes = [2, 8, 128], strides = [1, 1, 1]} : vector<8x8x128xf32> to vector<2x8x128xf32>
    %126 = arith.addf %124, %125 : vector<2x8x128xf32>
    %127 = vector.extract_strided_slice %121 {offsets = [6, 0, 0], sizes = [2, 8, 128], strides = [1, 1, 1]} : vector<8x8x128xf32> to vector<2x8x128xf32>
    %128 = arith.addf %126, %127 : vector<2x8x128xf32>
    %129 = vector.shape_cast %128 : vector<2x8x128xf32> to vector<16x128xf32>
    %130 = arith.addf %129, %34 : vector<16x128xf32>
    %c0_39 = arith.constant 0 : index
    %c9 = arith.constant 9 : index
    %c0_40 = arith.constant 0 : index
    %131 = vector.load %arg3[%c0_39, %c9, %c0_40] : memref<1x16x128xf32, #tpu.memory_space<vmem>>, vector<1x1x128xf32>
    %132 = vector.shape_cast %131 : vector<1x1x128xf32> to vector<1x128xf32>
    %c0_41 = arith.constant 0 : index
    %c10 = arith.constant 10 : index
    %c0_42 = arith.constant 0 : index
    %133 = vector.load %arg3[%c0_41, %c10, %c0_42] : memref<1x16x128xf32, #tpu.memory_space<vmem>>, vector<1x1x128xf32>
    %134 = vector.shape_cast %133 : vector<1x1x128xf32> to vector<1x128xf32>
    %cst_43 = arith.constant dense<0.000000e+00> : vector<16xf32>
    %135 = vector.multi_reduction <add>, %130, %cst_43 [1] : vector<16x128xf32> to vector<16xf32>
    %136 = vector.shape_cast %135 : vector<16xf32> to vector<16x1xf32>
    %cst_44 = arith.constant 1.280000e+02 : f32
    %137 = vector.broadcast %cst_44 : f32 to vector<16x1xf32>
    %138 = arith.divf %136, %137 : vector<16x1xf32>
    %139 = vector.broadcast %138 : vector<16x1xf32> to vector<16x128xf32>
    %140 = arith.subf %130, %139 : vector<16x128xf32>
    %141 = arith.mulf %140, %140 : vector<16x128xf32>
    %cst_45 = arith.constant dense<0.000000e+00> : vector<16xf32>
    %142 = vector.multi_reduction <add>, %141, %cst_45 [1] : vector<16x128xf32> to vector<16xf32>
    %143 = vector.shape_cast %142 : vector<16xf32> to vector<16x1xf32>
    %cst_46 = arith.constant 1.280000e+02 : f32
    %144 = vector.broadcast %cst_46 : f32 to vector<16x1xf32>
    %145 = arith.divf %143, %144 : vector<16x1xf32>
    %146 = vector.broadcast %138 : vector<16x1xf32> to vector<16x128xf32>
    %147 = arith.subf %130, %146 : vector<16x128xf32>
    %cst_47 = arith.constant 9.99999974E-6 : f32
    %148 = vector.broadcast %cst_47 : f32 to vector<16x1xf32>
    %149 = arith.addf %145, %148 : vector<16x1xf32>
    %150 = math.rsqrt %149 : vector<16x1xf32>
    %151 = vector.broadcast %150 : vector<16x1xf32> to vector<16x128xf32>
    %152 = arith.mulf %147, %151 : vector<16x128xf32>
    %153 = vector.broadcast %132 : vector<1x128xf32> to vector<16x128xf32>
    %154 = arith.mulf %152, %153 : vector<16x128xf32>
    %155 = vector.broadcast %134 : vector<1x128xf32> to vector<16x128xf32>
    %156 = arith.addf %154, %155 : vector<16x128xf32>
    %c0_48 = arith.constant 0 : index
    %c0_49 = arith.constant 0 : index
    %c768 = arith.constant 768 : index
    %157 = vector.load %arg2[%c0_48, %c0_49, %c768] : memref<1x128x1280xf32, #tpu.memory_space<vmem>>, vector<1x128x256xf32>
    %158 = vector.shape_cast %157 : vector<1x128x256xf32> to vector<128x256xf32>
    %cst_50 = arith.constant dense<0.000000e+00> : vector<16x256xf32>
    %159 = tpu.matmul %156, %158, %cst_50 {dimension_numbers = #tpu.dot_dimension_numbers<[1], [0], [0], [1], [0, 0, 1, 1], [], []>} : vector<16x128xf32>, vector<128x256xf32>, vector<16x256xf32> -> vector<16x256xf32>
    %160 = vector.extract_strided_slice %159 {offsets = [0, 0], sizes = [16, 128], strides = [1, 1]} : vector<16x256xf32> to vector<16x128xf32>
    %c0_51 = arith.constant 0 : index
    %c6 = arith.constant 6 : index
    %c0_52 = arith.constant 0 : index
    %161 = vector.load %arg3[%c0_51, %c6, %c0_52] : memref<1x16x128xf32, #tpu.memory_space<vmem>>, vector<1x1x128xf32>
    %162 = vector.shape_cast %161 : vector<1x1x128xf32> to vector<1x128xf32>
    %163 = vector.broadcast %162 : vector<1x128xf32> to vector<16x128xf32>
    %164 = arith.addf %160, %163 : vector<16x128xf32>
    %cst_53 = arith.constant 0.000000e+00 : f32
    %165 = vector.broadcast %cst_53 : f32 to vector<16x128xf32>
    %166 = arith.maximumf %164, %165 : vector<16x128xf32>
    %167 = vector.extract_strided_slice %159 {offsets = [0, 128], sizes = [16, 128], strides = [1, 1]} : vector<16x256xf32> to vector<16x128xf32>
    %c0_54 = arith.constant 0 : index
    %c7 = arith.constant 7 : index
    %c0_55 = arith.constant 0 : index
    %168 = vector.load %arg3[%c0_54, %c7, %c0_55] : memref<1x16x128xf32, #tpu.memory_space<vmem>>, vector<1x1x128xf32>
    %169 = vector.shape_cast %168 : vector<1x1x128xf32> to vector<1x128xf32>
    %170 = vector.broadcast %169 : vector<1x128xf32> to vector<16x128xf32>
    %171 = arith.addf %167, %170 : vector<16x128xf32>
    %cst_56 = arith.constant 0.000000e+00 : f32
    %172 = vector.broadcast %cst_56 : f32 to vector<16x128xf32>
    %173 = arith.maximumf %171, %172 : vector<16x128xf32>
    %c0_57 = arith.constant 0 : index
    %c0_58 = arith.constant 0 : index
    %c1024 = arith.constant 1024 : index
    %174 = vector.load %arg2[%c0_57, %c0_58, %c1024] : memref<1x128x1280xf32, #tpu.memory_space<vmem>>, vector<1x128x128xf32>
    %175 = vector.shape_cast %174 : vector<1x128x128xf32> to vector<128x128xf32>
    %cst_59 = arith.constant dense<0.000000e+00> : vector<16x128xf32>
    %176 = tpu.matmul %166, %175, %cst_59 {dimension_numbers = #tpu.dot_dimension_numbers<[1], [0], [0], [1], [0, 0, 1, 1], [], []>} : vector<16x128xf32>, vector<128x128xf32>, vector<16x128xf32> -> vector<16x128xf32>
    %c0_60 = arith.constant 0 : index
    %c0_61 = arith.constant 0 : index
    %c1152 = arith.constant 1152 : index
    %177 = vector.load %arg2[%c0_60, %c0_61, %c1152] : memref<1x128x1280xf32, #tpu.memory_space<vmem>>, vector<1x128x128xf32>
    %178 = vector.shape_cast %177 : vector<1x128x128xf32> to vector<128x128xf32>
    %cst_62 = arith.constant dense<0.000000e+00> : vector<16x128xf32>
    %179 = tpu.matmul %173, %178, %cst_62 {dimension_numbers = #tpu.dot_dimension_numbers<[1], [0], [0], [1], [0, 0, 1, 1], [], []>} : vector<16x128xf32>, vector<128x128xf32>, vector<16x128xf32> -> vector<16x128xf32>
    %180 = arith.addf %176, %179 : vector<16x128xf32>
    %c0_63 = arith.constant 0 : index
    %c8 = arith.constant 8 : index
    %c0_64 = arith.constant 0 : index
    %181 = vector.load %arg3[%c0_63, %c8, %c0_64] : memref<1x16x128xf32, #tpu.memory_space<vmem>>, vector<1x1x128xf32>
    %182 = vector.shape_cast %181 : vector<1x1x128xf32> to vector<1x128xf32>
    %183 = vector.broadcast %182 : vector<1x128xf32> to vector<16x128xf32>
    %184 = arith.addf %180, %183 : vector<16x128xf32>
    %185 = arith.addf %156, %184 : vector<16x128xf32>
    %c0_65 = arith.constant 0 : index
    %c11 = arith.constant 11 : index
    %c0_66 = arith.constant 0 : index
    %186 = vector.load %arg3[%c0_65, %c11, %c0_66] : memref<1x16x128xf32, #tpu.memory_space<vmem>>, vector<1x1x128xf32>
    %187 = vector.shape_cast %186 : vector<1x1x128xf32> to vector<1x128xf32>
    %c0_67 = arith.constant 0 : index
    %c12 = arith.constant 12 : index
    %c0_68 = arith.constant 0 : index
    %188 = vector.load %arg3[%c0_67, %c12, %c0_68] : memref<1x16x128xf32, #tpu.memory_space<vmem>>, vector<1x1x128xf32>
    %189 = vector.shape_cast %188 : vector<1x1x128xf32> to vector<1x128xf32>
    %cst_69 = arith.constant dense<0.000000e+00> : vector<16xf32>
    %190 = vector.multi_reduction <add>, %185, %cst_69 [1] : vector<16x128xf32> to vector<16xf32>
    %191 = vector.shape_cast %190 : vector<16xf32> to vector<16x1xf32>
    %cst_70 = arith.constant 1.280000e+02 : f32
    %192 = vector.broadcast %cst_70 : f32 to vector<16x1xf32>
    %193 = arith.divf %191, %192 : vector<16x1xf32>
    %194 = vector.broadcast %193 : vector<16x1xf32> to vector<16x128xf32>
    %195 = arith.subf %185, %194 : vector<16x128xf32>
    %196 = arith.mulf %195, %195 : vector<16x128xf32>
    %cst_71 = arith.constant dense<0.000000e+00> : vector<16xf32>
    %197 = vector.multi_reduction <add>, %196, %cst_71 [1] : vector<16x128xf32> to vector<16xf32>
    %198 = vector.shape_cast %197 : vector<16xf32> to vector<16x1xf32>
    %cst_72 = arith.constant 1.280000e+02 : f32
    %199 = vector.broadcast %cst_72 : f32 to vector<16x1xf32>
    %200 = arith.divf %198, %199 : vector<16x1xf32>
    %201 = vector.broadcast %193 : vector<16x1xf32> to vector<16x128xf32>
    %202 = arith.subf %185, %201 : vector<16x128xf32>
    %cst_73 = arith.constant 9.99999974E-6 : f32
    %203 = vector.broadcast %cst_73 : f32 to vector<16x1xf32>
    %204 = arith.addf %200, %203 : vector<16x1xf32>
    %205 = math.rsqrt %204 : vector<16x1xf32>
    %206 = vector.broadcast %205 : vector<16x1xf32> to vector<16x128xf32>
    %207 = arith.mulf %202, %206 : vector<16x128xf32>
    %208 = vector.broadcast %187 : vector<1x128xf32> to vector<16x128xf32>
    %209 = arith.mulf %207, %208 : vector<16x128xf32>
    %210 = vector.broadcast %189 : vector<1x128xf32> to vector<16x128xf32>
    %211 = arith.addf %209, %210 : vector<16x128xf32>
    %c0_74 = arith.constant 0 : index
    %c0_75 = arith.constant 0 : index
    %212 = vector.load %arg6[%c0_74, %c0_75] : memref<16x128xf32, #tpu.memory_space<vmem>>, vector<16x128xf32>
    tpu.vector_store %arg6[%c0_74, %c0_75], %211 {strides = array<i32>} : memref<16x128xf32, #tpu.memory_space<vmem>>, vector<16x128xf32>,
    %c1_i32 = arith.constant 1 : i32
    %213 = arith.cmpi eq, %arg0, %c1_i32 : i32
    %214 = arith.extui %213 : i1 to i32
    %c0_i32_76 = arith.constant 0 : i32
    %215 = arith.cmpi ne, %214, %c0_i32_76 : i32
    scf.if %215 {
      %c0_77 = arith.constant 0 : index
      %c0_78 = arith.constant 0 : index
      %216 = vector.load %arg4[%c0_77, %c0_78] : memref<136x128xf32, #tpu.memory_space<vmem>>, vector<128x128xf32>
      %c128 = arith.constant 128 : index
      %c0_79 = arith.constant 0 : index
      %217 = vector.load %arg4[%c128, %c0_79] : memref<136x128xf32, #tpu.memory_space<vmem>>, vector<1x128xf32>
      %c129 = arith.constant 129 : index
      %c0_80 = arith.constant 0 : index
      %218 = vector.load %arg4[%c129, %c0_80] : memref<136x128xf32, #tpu.memory_space<vmem>>, vector<1x128xf32>
      %cst_81 = arith.constant dense<0.000000e+00> : vector<16x128xf32>
      %219 = tpu.matmul %211, %216, %cst_81 {dimension_numbers = #tpu.dot_dimension_numbers<[1], [0], [0], [1], [0, 0, 1, 1], [], []>} : vector<16x128xf32>, vector<128x128xf32>, vector<16x128xf32> -> vector<16x128xf32>
      %220 = vector.broadcast %217 : vector<1x128xf32> to vector<16x128xf32>
      %221 = arith.addf %219, %220 : vector<16x128xf32>
      %cst_82 = arith.constant 0.000000e+00 : f32
      %222 = vector.broadcast %cst_82 : f32 to vector<16x128xf32>
      %223 = arith.maximumf %221, %222 : vector<16x128xf32>
      %224 = vector.shape_cast %223 : vector<16x128xf32> to vector<2x8x128xf32>
      %225 = vector.shape_cast %218 : vector<1x128xf32> to vector<1x1x128xf32>
      %226 = vector.broadcast %225 : vector<1x1x128xf32> to vector<2x8x128xf32>
      %227 = arith.mulf %224, %226 : vector<2x8x128xf32>
      %cst_83 = arith.constant dense<0.000000e+00> : vector<2x8xf32>
      %228 = vector.multi_reduction <add>, %227, %cst_83 [2] : vector<2x8x128xf32> to vector<2x8xf32>
      %229 = tpu.iota {dimensions = array<i32: 1>} : vector<2x8xi32>
      %c6_i32 = arith.constant 6 : i32
      %230 = vector.broadcast %c6_i32 : i32 to vector<2x8xi32>
      %231 = arith.cmpi sge, %229, %230 : vector<2x8xi32>
      %cst_84 = arith.constant -1.000000e+20 : f32
      %232 = vector.broadcast %cst_84 : f32 to vector<2x8xf32>
      %233 = arith.select %231, %232, %228 : vector<2x8xi1>, vector<2x8xf32>
      %cst_85 = arith.constant dense<0xFF800000> : vector<2xf32>
      %234 = vector.multi_reduction <maximumf>, %233, %cst_85 [1] : vector<2x8xf32> to vector<2xf32>
      %235 = vector.shape_cast %234 : vector<2xf32> to vector<2x1xf32>
      %236 = vector.broadcast %235 : vector<2x1xf32> to vector<2x8xf32>
      %237 = arith.subf %233, %236 : vector<2x8xf32>
      %238 = math.exp %237 : vector<2x8xf32>
      %cst_86 = arith.constant dense<0.000000e+00> : vector<2xf32>
      %239 = vector.multi_reduction <add>, %238, %cst_86 [1] : vector<2x8xf32> to vector<2xf32>
      %240 = vector.shape_cast %239 : vector<2xf32> to vector<2x1xf32>
      %241 = tpu.reciprocal %240 {approx = true} : vector<2x1xf32> -> vector<2x1xf32>
      %242 = vector.broadcast %241 : vector<2x1xf32> to vector<2x8xf32>
      %243 = arith.mulf %238, %242 : vector<2x8xf32>
      %c0_87 = arith.constant 0 : index
      %c0_88 = arith.constant 0 : index
      %244 = vector.load %arg5[%c0_87, %c0_88] : memref<2x8xf32, #tpu.memory_space<vmem>>, vector<2x8xf32>
      tpu.vector_store %arg5[%c0_87, %c0_88], %243 {strides = array<i32>} : memref<2x8xf32, #tpu.memory_space<vmem>>, vector<2x8xf32>,
    } else {
    }
    return
  }
  func.func @transform_0(%arg0: i32) -> (i32, i32, i32) {
    %c0_i32 = arith.constant 0 : i32
    %c0_i32_0 = arith.constant 0 : i32
    %c0_i32_1 = arith.constant 0 : i32
    %c0_i32_2 = arith.constant 0 : i32
    return %c0_i32, %c0_i32_0, %c0_i32_1 : i32, i32, i32
  }
  func.func @transform_1(%arg0: i32) -> (i32, i32, i32) {
    %c0_i32 = arith.constant 0 : i32
    %c0_i32_0 = arith.constant 0 : i32
    %c0_i32_1 = arith.constant 0 : i32
    return %arg0, %c0_i32, %c0_i32_0 : i32, i32, i32
  }
  func.func @transform_2(%arg0: i32) -> (i32, i32, i32) {
    %c0_i32 = arith.constant 0 : i32
    %c0_i32_0 = arith.constant 0 : i32
    %c0_i32_1 = arith.constant 0 : i32
    return %arg0, %c0_i32, %c0_i32_0 : i32, i32, i32
  }
  func.func @transform_3(%arg0: i32) -> (i32, i32) {
    %c0_i32 = arith.constant 0 : i32
    %c0_i32_0 = arith.constant 0 : i32
    %c0_i32_1 = arith.constant 0 : i32
    return %c0_i32, %c0_i32_0 : i32, i32
  }
  func.func @transform_4(%arg0: i32) -> (i32, i32) {
    %c0_i32 = arith.constant 0 : i32
    %c0_i32_0 = arith.constant 0 : i32
    %c0_i32_1 = arith.constant 0 : i32
    return %c0_i32, %c0_i32_0 : i32, i32
  }
}

</mosaic_0001>

<llo_original>
// kernel: tpu_custom_call.1
$region0: #{tpu_custom_call.1}
  #allocation0 [shape = 'u32[]', space=smem, size = 0x4, offset = 0x4, fixed_abs, tag = 'smem constant byte address 0x4 - core index']
  #allocation1 [shape = 'u32[72,128]{1,0:T(1,128)}', space=vmem, size = 0x9000, scoped, tag = 'internal scratch']
  #allocation2 [shape = 'f32[16,128]{1,0:T(8,128)}', space=vmem, size = 0x2000, scoped, tag = 'scratch operand']
  %s0 = inlined_call_operand.hbm [shape: f32[2,8,128], index: 0, kind: input, shape index: {}]
  %s1 = inlined_call_operand.hbm [shape: f32[2,128,1280], index: 1, kind: input, shape index: {}]
  %s2 = inlined_call_operand.hbm [shape: f32[2,16,128], index: 2, kind: input, shape index: {}]
  %s3 = inlined_call_operand.hbm [shape: f32[136,128], index: 3, kind: input, shape index: {}]
  %s4 = inlined_call_operand.hbm [shape: f32[2,8], index: 4, kind: output, shape index: {}]
  %s5 = sld [smem:[#allocation0]]
  $region73: #{tpu_custom_call.1} parent=0
    _
  %s7 = ssub.s32 1, %s5
  %s8 = scalar_select 0, %s7, %s5
  $region1: #{tpu_custom_call.1} parent=0
    #allocation3 [shape = 'u8[8192]{0}', space=vmem, size = 0x2000, scoped, tag = 'input window, operand 0, single buffered']
    #allocation4 [shape = 's32[2]{0}', space=sflag, size = 0x8, scoped, tag = 'scoped memory for tpu_custom_call.1']
    #allocation5 [shape = 's32[2]{0}', space=sflag, size = 0x8, scoped, tag = 'scoped memory for tpu_custom_call.1']
    #allocation6 [shape = 'u8[1310720]{0}', space=vmem, size = 0x140000, scoped, tag = 'input window, operand 1']
    #allocation7 [shape = 's32[2]{0}', space=sflag, size = 0x8, scoped, tag = 'scoped memory for tpu_custom_call.1']
    #allocation8 [shape = 'u8[16384]{0}', space=vmem, size = 0x4000, scoped, tag = 'input window, operand 2']
    #allocation9 [shape = 'u8[69632]{0}', space=vmem, size = 0x11000, scoped, tag = 'input window, operand 3, single buffered']
    #allocation10 [shape = 's32[1]{0}', space=sflag, size = 0x4, scoped, tag = 'scoped memory for tpu_custom_call.1']
    #allocation11 [shape = 'u8[1024]{0}', space=vmem, size = 0x400, scoped, tag = 'output window, operand 0, single buffered']
    %9 = vsyncpa [#allocation4], 0
    %10 = vsyncpa [#allocation7], 0
    %s11 = scalar_lea.sflag [#allocation7], 1
    %12 = vsyncpa %s11, 0
    %13 = vsyncpa [#allocation10], 0
    %14 = vsyncpa [#allocation5], 0
    loop: start=0, step=1, limit=4
    $region2: #{tpu_custom_call.1} parent=1 // loop_pre_header
      _
    $region3: #{tpu_custom_call.1} parent=1 // loop_header
      %s16 = sphi 0, %s20
      %p17 = scmp.ge.s32.totalorder %s16, 4
      %s24 = sphi 0, %s24
      %s26 = sphi 0, %s24
      %s27 = sphi 0, %s26
      %s41 = sphi 0, %s27
      %s47 = sphi 0, %s49
      %s50 = sphi 0, %s47
      %s51 = sphi 0, %s50
      %s67 = sphi 0, %s51
      %s73 = sphi 0, %s75
      %s76 = sphi 0, %s73
      %s77 = sphi 0, %s76
      %s93 = sphi 0, %s77
      %s97 = sphi 0, %s97
      %s99 = sphi 0, %s97
      %s100 = sphi 0, %s99
      %s114 = sphi 0, %s100
      %s118 = sphi 0, %s118
      %s120 = sphi 0, %s118
      %s121 = sphi 0, %s120
      %s135 = sphi 0, %s121
    $region4: #{tpu_custom_call.1} parent=1 // loop_header_branch
      %19 = sbr.rel (%p17) target = $region8
    $region5: #{tpu_custom_call.1} parent=1 // loop_body
      %s21 = ssub.s32 %s16, 1
      %s22 = ssub.s32 %s16, 2
      %s23 = sadd.s32 %s16, 1
      %s25 = sadd.s32 %s24, 1
      %p28 = scmp.eq.s32.totalorder %s16, 1
      %p29 = scmp.ne.s32.totalorder %s24, %s26
      %p30 = scmp.eq.s32.totalorder %s16, 0
      %p31 = por %p29, %p30
      %p32 = scmp.ne.s32.totalorder %s24, %s26
      %p33 = scmp.eq.s32.totalorder %s21, 1
      %p34 = por %p32, %p33
      %p35 = scmp.ne.s32.totalorder %s26, %s27
      %p36 = scmp.eq.s32.totalorder %s21, 0
      %p37 = por %p35, %p36
      %p38 = scmp.ne.s32.totalorder %s26, %s27
      %p39 = scmp.eq.s32.totalorder %s22, 1
      %p40 = por %p38, %p39
      %p42 = scmp.ne.s32.totalorder %s27, %s41
      %p43 = scmp.eq.s32.totalorder %s22, 0
      %p44 = por %p42, %p43
      %s45 = ssub.s32 %s16, %s23
      %p46 = scmp.eq.s32.totalorder %s45, 0
      %s48 = sadd.s32 %s47, 1
      %s49 = scalar_select %p46, %s47, %s48
      %p52 = pneg %p46
      %p53 = scmp.eq.s32.totalorder %s16, 1
      %p54 = por %p52, %p53
      %p55 = scmp.ne.s32.totalorder %s47, %s50
      %p56 = scmp.eq.s32.totalorder %s16, 0
      %p57 = por %p55, %p56
      %p58 = scmp.ne.s32.totalorder %s47, %s50
      %p59 = scmp.eq.s32.totalorder %s21, 1
      %p60 = por %p58, %p59
      %p61 = scmp.ne.s32.totalorder %s50, %s51
      %p62 = scmp.eq.s32.totalorder %s21, 0
      %p63 = por %p61, %p62
      %p64 = scmp.ne.s32.totalorder %s50, %s51
      %p65 = scmp.eq.s32.totalorder %s22, 1
      %p66 = por %p64, %p65
      %p68 = scmp.ne.s32.totalorder %s51, %s67
      %p69 = scmp.eq.s32.totalorder %s22, 0
      %p70 = por %p68, %p69
      %s71 = ssub.s32 %s16, %s23
      %p72 = scmp.eq.s32.totalorder %s71, 0
      %s74 = sadd.s32 %s73, 1
      %s75 = scalar_select %p72, %s73, %s74
      %p78 = pneg %p72
      %p79 = scmp.eq.s32.totalorder %s16, 1
      %p80 = por %p78, %p79
      %p81 = scmp.ne.s32.totalorder %s73, %s76
      %p82 = scmp.eq.s32.totalorder %s16, 0
      %p83 = por %p81, %p82
      %p84 = scmp.ne.s32.totalorder %s73, %s76
      %p85 = scmp.eq.s32.totalorder %s21, 1
      %p86 = por %p84, %p85
      %p87 = scmp.ne.s32.totalorder %s76, %s77
      %p88 = scmp.eq.s32.totalorder %s21, 0
      %p89 = por %p87, %p88
      %p90 = scmp.ne.s32.totalorder %s76, %s77
      %p91 = scmp.eq.s32.totalorder %s22, 1
      %p92 = por %p90, %p91
      %p94 = scmp.ne.s32.totalorder %s77, %s93
      %p95 = scmp.eq.s32.totalorder %s22, 0
      %p96 = por %p94, %p95
      %s98 = sadd.s32 %s97, 1
      %p101 = scmp.eq.s32.totalorder %s16, 1
      %p102 = scmp.ne.s32.totalorder %s97, %s99
      %p103 = scmp.eq.s32.totalorder %s16, 0
      %p104 = por %p102, %p103
      %p105 = scmp.ne.s32.totalorder %s97, %s99
      %p106 = scmp.eq.s32.totalorder %s21, 1
      %p107 = por %p105, %p106
      %p108 = scmp.ne.s32.totalorder %s99, %s100
      %p109 = scmp.eq.s32.totalorder %s21, 0
      %p110 = por %p108, %p109
      %p111 = scmp.ne.s32.totalorder %s99, %s100
      %p112 = scmp.eq.s32.totalorder %s22, 1
      %p113 = por %p111, %p112
      %p115 = scmp.ne.s32.totalorder %s100, %s114
      %p116 = scmp.eq.s32.totalorder %s22, 0
      %p117 = por %p115, %p116
      %s119 = sadd.s32 %s118, 1
      %p122 = scmp.eq.s32.totalorder %s16, 1
      %p123 = scmp.ne.s32.totalorder %s118, %s120
      %p124 = scmp.eq.s32.totalorder %s16, 0
      %p125 = por %p123, %p124
      %p126 = scmp.ne.s32.totalorder %s118, %s120
      %p127 = scmp.eq.s32.totalorder %s21, 1
      %p128 = por %p126, %p127
      %p129 = scmp.ne.s32.totalorder %s120, %s121
      %p130 = scmp.eq.s32.totalorder %s21, 0
      %p131 = por %p129, %p130
      %p132 = scmp.ne.s32.totalorder %s120, %s121
      %p133 = scmp.eq.s32.totalorder %s22, 1
      %p134 = por %p132, %p133
      %p136 = scmp.ne.s32.totalorder %s121, %s135
      %p137 = scmp.eq.s32.totalorder %s22, 0
      %p138 = por %p136, %p137
      %p139 = scmp.le.s32.totalorder 1, %s16
      %p140 = scmp.lt.s32.totalorder %s16, 3
      %p141 = pnand %p139, %p140
      %p142 = pneg %p141
      // Predicated region
      $region9: #{tpu_custom_call.1} parent=5 // pred_check
        _
      $region10: #{tpu_custom_call.1} parent=5 // pred_check_branch
        %144 = sbr.rel (%p141) target = $region12
      $region11: #{tpu_custom_call.1} parent=5 // pred_region
        %s145 = ssub.s32 %s16, 1
        // Predicated region
        $region13: #{tpu_custom_call.1} parent=11 // pred_check
          %p146 = pneg %p37
        $region14: #{tpu_custom_call.1} parent=11 // pred_check_branch
          %148 = sbr.rel (%p146) target = $region16
        $region15: #{tpu_custom_call.1} parent=11 // pred_region
          %150 = vsyncadd [#allocation4], 0
          %s151 = sshll.u32 %s0, 4
          %s152 = int_to_ptr.hbm [resolvable:$true] %s151
          %s153 = sshll.u32 [#allocation3], 4
          %s154 = int_to_ptr.vmem [resolvable:$true] %s153
          %159 = dma.hbm_to_vmem [thread:$0]  %s152, 256, %s154, [#allocation4], 128, 128, 8
        $region16: #{tpu_custom_call.1} parent=11 // pred_fallthru
          _
        // Predicated region
        $region17: #{tpu_custom_call.1} parent=11 // pred_check
          %p160 = pneg %p110
        $region18: #{tpu_custom_call.1} parent=11 // pred_check_branch
          %162 = sbr.rel (%p160) target = $region20
        $region19: #{tpu_custom_call.1} parent=11 // pred_region
          %164 = vsyncadd [#allocation10], 0
          %s165 = sshll.u32 %s3, 4
          %s166 = int_to_ptr.hbm [resolvable:$true] %s165
          %s167 = sshll.u32 [#allocation9], 4
          %s168 = int_to_ptr.vmem [resolvable:$true] %s167
          %173 = dma.hbm_to_vmem [thread:$0]  %s166, 2176, %s168, [#allocation10], 128, 128, 8
        $region20: #{tpu_custom_call.1} parent=11 // pred_fallthru
          _
      $region12: #{tpu_custom_call.1} parent=5 // pred_fallthru
        _
      %p174 = scmp.lt.s32.totalorder %s16, 2
      // Predicated region
      $region21: #{tpu_custom_call.1} parent=5 // pred_check
        %p175 = pneg %p174
      $region22: #{tpu_custom_call.1} parent=5 // pred_check_branch
        %177 = sbr.rel (%p175) target = $region24
      $region23: #{tpu_custom_call.1} parent=5 // pred_region
        // Predicated region
        $region25: #{tpu_custom_call.1} parent=23 // pred_check
          %p178 = pneg %p57
        $region26: #{tpu_custom_call.1} parent=23 // pred_check_branch
          %180 = sbr.rel (%p178) target = $region28
        $region27: #{tpu_custom_call.1} parent=23 // pred_region
          %s181 = sand.u32 %s16, 1
          %s182 = scalar_lea.sflag [#allocation7], %s181
          %s183 = sand.u32 %s47, 1
          %s184 = smul.addr %s183, 1280
          %s185 = scalar_lea.vmem [#allocation6], %s184
          %187 = vsyncadd %s182, 0
          %s188 = smul.addr %s16, 160
          %s189 = smul.addr %s188, 8
          %s190 = scalar_lea.hbm %s1, %s189
          %s191 = sshll.u32 %s190, 4
          %s192 = int_to_ptr.hbm [resolvable:$true] %s191
          %s193 = sshll.u32 %s185, 4
          %s194 = int_to_ptr.vmem [resolvable:$true] %s193
          %199 = dma.hbm_to_vmem [thread:$0]  %s192, 20480, %s194, %s182, 1280, 1280, 80
        $region28: #{tpu_custom_call.1} parent=23 // pred_fallthru
          _
        // Predicated region
        $region29: #{tpu_custom_call.1} parent=23 // pred_check
          %p200 = pneg %p83
        $region30: #{tpu_custom_call.1} parent=23 // pred_check_branch
          %202 = sbr.rel (%p200) target = $region32
        $region31: #{tpu_custom_call.1} parent=23 // pred_region
          %s203 = sand.u32 %s16, 1
          %s204 = scalar_lea.sflag [#allocation7], %s203
          %s205 = sand.u32 %s73, 1
          %s206 = smul.addr %s205, 16
          %s207 = scalar_lea.vmem [#allocation8], %s206
          %209 = vsyncadd %s204, 0
          %s210 = smul.addr %s16, 2
          %s211 = smul.addr %s210, 8
          %s212 = scalar_lea.hbm %s2, %s211
          %s213 = sshll.u32 %s212, 4
          %s214 = int_to_ptr.hbm [resolvable:$true] %s213
          %s215 = sshll.u32 %s207, 4
          %s216 = int_to_ptr.vmem [resolvable:$true] %s215
          %221 = dma.hbm_to_vmem [thread:$0]  %s214, 256, %s216, %s204, 128, 128, 8
        $region32: #{tpu_custom_call.1} parent=23 // pred_fallthru
          _
      $region24: #{tpu_custom_call.1} parent=5 // pred_fallthru
        _
      %p222 = scmp.le.s32.totalorder 1, %s16
      %p223 = scmp.lt.s32.totalorder %s16, 3
      %p224 = pnand %p222, %p223
      %p225 = pneg %p224
      // Predicated region
      $region33: #{tpu_custom_call.1} parent=5 // pred_check
        _
      $region34: #{tpu_custom_call.1} parent=5 // pred_check_branch
        %227 = sbr.rel (%p224) target = $region36
      $region35: #{tpu_custom_call.1} parent=5 // pred_region
        %s228 = ssub.s32 %s16, 1
        // Predicated region
        $region37: #{tpu_custom_call.1} parent=35 // pred_check
          %p229 = pneg %p37
        $region38: #{tpu_custom_call.1} parent=35 // pred_check_branch
          %231 = sbr.rel (%p229) target = $region40
        $region39: #{tpu_custom_call.1} parent=35 // pred_region
          %233 = dma.done [#allocation4], 256
        $region40: #{tpu_custom_call.1} parent=35 // pred_fallthru
          _
        %s234 = sand.u32 %s21, 1
        %s235 = scalar_lea.sflag [#allocation7], %s234
        %s236 = sand.u32 %s50, 1
        %s237 = smul.addr %s236, 1280
        %s238 = scalar_lea.vmem [#allocation6], %s237
        // Predicated region
        $region41: #{tpu_custom_call.1} parent=35 // pred_check
          %p239 = pneg %p63
        $region42: #{tpu_custom_call.1} parent=35 // pred_check_branch
          %241 = sbr.rel (%p239) target = $region44
        $region43: #{tpu_custom_call.1} parent=35 // pred_region
          %243 = dma.done %s235, 20480
        $region44: #{tpu_custom_call.1} parent=35 // pred_fallthru
          _
        %s244 = sand.u32 %s21, 1
        %s245 = scalar_lea.sflag [#allocation7], %s244
        %s246 = sand.u32 %s76, 1
        %s247 = smul.addr %s246, 16
        %s248 = scalar_lea.vmem [#allocation8], %s247
        // Predicated region
        $region45: #{tpu_custom_call.1} parent=35 // pred_check
          %p249 = pneg %p89
        $region46: #{tpu_custom_call.1} parent=35 // pred_check_branch
          %251 = sbr.rel (%p249) target = $region48
        $region47: #{tpu_custom_call.1} parent=35 // pred_region
          %253 = dma.done %s245, 256
        $region48: #{tpu_custom_call.1} parent=35 // pred_fallthru
          _
        // Predicated region
        $region49: #{tpu_custom_call.1} parent=35 // pred_check
          %p254 = pneg %p110
        $region50: #{tpu_custom_call.1} parent=35 // pred_check_branch
          %256 = sbr.rel (%p254) target = $region52
        $region51: #{tpu_custom_call.1} parent=35 // pred_region
          %258 = dma.done [#allocation10], 2176
        $region52: #{tpu_custom_call.1} parent=35 // pred_fallthru
          _
        %p259 = pneg %p37
        %p260 = pneg %p34
        %s261 = sand.u32 %s21, 1
        %s262 = scalar_lea.sflag [#allocation7], %s261
        %s263 = sand.u32 %s50, 1
        %s264 = smul.addr %s263, 1280
        %s265 = scalar_lea.vmem [#allocation6], %s264
        %p266 = pneg %p63
        %p267 = pneg %p60
        %s268 = sand.u32 %s21, 1
        %s269 = scalar_lea.sflag [#allocation7], %s268
        %s270 = sand.u32 %s76, 1
        %s271 = smul.addr %s270, 16
        %s272 = scalar_lea.vmem [#allocation8], %s271
        %p273 = pneg %p89
        %p274 = pneg %p86
        %p275 = pneg %p110
        %p276 = pneg %p107
        %p277 = pneg %p131
        %p278 = pneg %p128
        %p279 = scmp.eq.s32.totalorder %s21, 0
        // Predicated region
        $region53: #{tpu_custom_call.1} parent=35 // pred_check
          %p280 = pneg %p279
        $region54: #{tpu_custom_call.1} parent=35 // pred_check_branch
          %282 = sbr.rel (%p280) target = $region56
        $region55: #{tpu_custom_call.1} parent=35 // pred_region
          %v283 = vld [vmem:[#allocation3] sm:$0xff]
          %v284 = vld [vmem:[#allocation3 + $0x8] sm:$0xff]
          %285 = vst [vmem:[#allocation2] sm:$0xff] %v283
          %286 = vst [vmem:[#allocation2 + $0x8] sm:$0xff] %v284
        $region56: #{tpu_custom_call.1} parent=35 // pred_fallthru
          _
        %v287 = vld [vmem:[#allocation2] sm:$0xff]
        %v288 = vld [vmem:[#allocation2 + $0x8] sm:$0xff]
        %v289 = vld [vmem:[%s238] sm:$0xff]
        %v290 = vld [vmem:[%s238 + $0x8] sm:$0xff]
        %v291 = vld [vmem:[%s238 + $0x10] sm:$0xff]
        %v292 = vld [vmem:[%s238 + $0x50] sm:$0xff]
        %v293 = vld [vmem:[%s238 + $0x58] sm:$0xff]
        %v294 = vld [vmem:[%s238 + $0x60] sm:$0xff]
        %v295 = vld [vmem:[%s238 + $0xa0] sm:$0xff]
        %v296 = vld [vmem:[%s238 + $0xa8] sm:$0xff]
        %v297 = vld [vmem:[%s238 + $0xb0] sm:$0xff]
        %v298 = vld [vmem:[%s238 + $0xf0] sm:$0xff]
        %v299 = vld [vmem:[%s238 + $0xf8] sm:$0xff]
        %v300 = vld [vmem:[%s238 + $0x100] sm:$0xff]
        %v301 = vld [vmem:[%s238 + $0x140] sm:$0xff]
        %v302 = vld [vmem:[%s238 + $0x148] sm:$0xff]
        %v303 = vld [vmem:[%s238 + $0x150] sm:$0xff]
        %v304 = vld [vmem:[%s238 + $0x190] sm:$0xff]
        %v305 = vld [vmem:[%s238 + $0x198] sm:$0xff]
        %v306 = vld [vmem:[%s238 + $0x1a0] sm:$0xff]
        %v307 = vld [vmem:[%s238 + $0x1e0] sm:$0xff]
        %v308 = vld [vmem:[%s238 + $0x1e8] sm:$0xff]
        %v309 = vld [vmem:[%s238 + $0x1f0] sm:$0xff]
        %v310 = vld [vmem:[%s238 + $0x230] sm:$0xff]
        %v311 = vld [vmem:[%s238 + $0x238] sm:$0xff]
        %v312 = vld [vmem:[%s238 + $0x240] sm:$0xff]
        %v313 = vld [vmem:[%s238 + $0x280] sm:$0xff]
        %v314 = vld [vmem:[%s238 + $0x288] sm:$0xff]
        %v315 = vld [vmem:[%s238 + $0x290] sm:$0xff]
        %v316 = vld [vmem:[%s238 + $0x2d0] sm:$0xff]
        %v317 = vld [vmem:[%s238 + $0x2d8] sm:$0xff]
        %v318 = vld [vmem:[%s238 + $0x2e0] sm:$0xff]
        %v319 = vld [vmem:[%s238 + $0x320] sm:$0xff]
        %v320 = vld [vmem:[%s238 + $0x328] sm:$0xff]
        %v321 = vld [vmem:[%s238 + $0x330] sm:$0xff]
        %v322 = vld [vmem:[%s238 + $0x370] sm:$0xff]
        %v323 = vld [vmem:[%s238 + $0x378] sm:$0xff]
        %v324 = vld [vmem:[%s238 + $0x380] sm:$0xff]
        %v325 = vld [vmem:[%s238 + $0x3c0] sm:$0xff]
        %v326 = vld [vmem:[%s238 + $0x3c8] sm:$0xff]
        %v327 = vld [vmem:[%s238 + $0x3d0] sm:$0xff]
        %v328 = vld [vmem:[%s238 + $0x410] sm:$0xff]
        %v329 = vld [vmem:[%s238 + $0x418] sm:$0xff]
        %v330 = vld [vmem:[%s238 + $0x420] sm:$0xff]
        %v331 = vld [vmem:[%s238 + $0x460] sm:$0xff]
        %v332 = vld [vmem:[%s238 + $0x468] sm:$0xff]
        %v333 = vld [vmem:[%s238 + $0x470] sm:$0xff]
        %v334 = vld [vmem:[%s238 + $0x4b0] sm:$0xff]
        %v335 = vld [vmem:[%s238 + $0x4b8] sm:$0xff]
        %v336 = vld [vmem:[%s238 + $0x4c0] sm:$0xff]
        %337 = vmatpush.msra.mxu0 %v334
        %338 = vmatpush.msra.mxu0 %v331
        %339 = vmatpush.msra.mxu0 %v328
        %340 = vmatpush.msra.mxu0 %v325
        %341 = vmatpush.msra.mxu0 %v322
        %342 = vmatpush.msra.mxu0 %v319
        %343 = vmatpush.msra.mxu0 %v316
        %344 = vmatpush.msra.mxu0 %v313
        %345 = vmatpush.msra.mxu0 %v310
        %346 = vmatpush.msra.mxu0 %v307
        %347 = vmatpush.msra.mxu0 %v304
        %348 = vmatpush.msra.mxu0 %v301
        %349 = vmatpush.msra.mxu0 %v298
        %350 = vmatpush.msra.mxu0 %v295
        %351 = vmatpush.msra.mxu0 %v292
        %352 = vmatpush.msra.mxu0 %v289
        %353 = vmatmul.f32.gmra.mxu0 %v287
        %v354 = vpop.f32.mrf.mxu0
        %v355 = vadd.f32 0.0, %v354
        %356 = vmatmul.f32.gmra.mxu0 %v288
        %v357 = vpop.f32.mrf.mxu0
        %v358 = vadd.f32 0.0, %v357
        %359 = vdwg.mxu0
        %360 = vmatpush.msra.mxu0 %v335
        %361 = vmatpush.msra.mxu0 %v332
        %362 = vmatpush.msra.mxu0 %v329
        %363 = vmatpush.msra.mxu0 %v326
        %364 = vmatpush.msra.mxu0 %v323
        %365 = vmatpush.msra.mxu0 %v320
        %366 = vmatpush.msra.mxu0 %v317
        %367 = vmatpush.msra.mxu0 %v314
        %368 = vmatpush.msra.mxu0 %v311
        %369 = vmatpush.msra.mxu0 %v308
        %370 = vmatpush.msra.mxu0 %v305
        %371 = vmatpush.msra.mxu0 %v302
        %372 = vmatpush.msra.mxu0 %v299
        %373 = vmatpush.msra.mxu0 %v296
        %374 = vmatpush.msra.mxu0 %v293
        %375 = vmatpush.msra.mxu0 %v290
        %376 = vmatmul.f32.gmra.mxu0 %v287
        %v377 = vpop.f32.mrf.mxu0
        %v378 = vadd.f32 0.0, %v377
        %379 = vmatmul.f32.gmra.mxu0 %v288
        %v380 = vpop.f32.mrf.mxu0
        %v381 = vadd.f32 0.0, %v380
        %382 = vdwg.mxu0
        %383 = vmatpush.msra.mxu0 %v336
        %384 = vmatpush.msra.mxu0 %v333
        %385 = vmatpush.msra.mxu0 %v330
        %386 = vmatpush.msra.mxu0 %v327
        %387 = vmatpush.msra.mxu0 %v324
        %388 = vmatpush.msra.mxu0 %v321
        %389 = vmatpush.msra.mxu0 %v318
        %390 = vmatpush.msra.mxu0 %v315
        %391 = vmatpush.msra.mxu0 %v312
        %392 = vmatpush.msra.mxu0 %v309
        %393 = vmatpush.msra.mxu0 %v306
        %394 = vmatpush.msra.mxu0 %v303
        %395 = vmatpush.msra.mxu0 %v300
        %396 = vmatpush.msra.mxu0 %v297
        %397 = vmatpush.msra.mxu0 %v294
        %398 = vmatpush.msra.mxu0 %v291
        %399 = vmatmul.f32.gmra.mxu0 %v287
        %v400 = vpop.f32.mrf.mxu0
        %v401 = vadd.f32 0.0, %v400
        %402 = vmatmul.f32.gmra.mxu0 %v288
        %v403 = vpop.f32.mrf.mxu0
        %v404 = vadd.f32 0.0, %v403
        %405 = vdwg.mxu0
        %v406 = vld [vmem:[%s248] sm:$0x1]
        %v407 = vperm.slane %v406, 0
        %v408 = vadd.f32 %v355, %v407
        %v409 = vadd.f32 %v358, %v407
        %v410 = vmax.f32 %v408, 0.0
        %v411 = vmax.f32 %v409, 0.0
        %v412 = vld [vmem:[%s248 + $0x1] sm:$0x1]
        %v413 = vperm.slane %v412, 0
        %v414 = vadd.f32 %v378, %v413
        %v415 = vadd.f32 %v381, %v413
        %v416 = vmax.f32 %v414, 0.0
        %v417 = vmax.f32 %v415, 0.0
        %v418 = vld [vmem:[%s248 + $0x2] sm:$0x1]
        %v419 = vperm.slane %v418, 0
        %v420 = vadd.f32 %v401, %v419
        %v421 = vadd.f32 %v404, %v419
        %v422 = vmax.f32 %v420, 0.0
        %v423 = vmax.f32 %v421, 0.0
        %v424 = vld [vmem:[%s238 + $0x18] sm:$0xff]
        %v425 = vld [vmem:[%s238 + $0x68] sm:$0xff]
        %v426 = vld [vmem:[%s238 + $0xb8] sm:$0xff]
        %v427 = vld [vmem:[%s238 + $0x108] sm:$0xff]
        %v428 = vld [vmem:[%s238 + $0x158] sm:$0xff]
        %v429 = vld [vmem:[%s238 + $0x1a8] sm:$0xff]
        %v430 = vld [vmem:[%s238 + $0x1f8] sm:$0xff]
        %v431 = vld [vmem:[%s238 + $0x248] sm:$0xff]
        %v432 = vld [vmem:[%s238 + $0x298] sm:$0xff]
        %v433 = vld [vmem:[%s238 + $0x2e8] sm:$0xff]
        %v434 = vld [vmem:[%s238 + $0x338] sm:$0xff]
        %v435 = vld [vmem:[%s238 + $0x388] sm:$0xff]
        %v436 = vld [vmem:[%s238 + $0x3d8] sm:$0xff]
        %v437 = vld [vmem:[%s238 + $0x428] sm:$0xff]
        %v438 = vld [vmem:[%s238 + $0x478] sm:$0xff]
        %v439 = vld [vmem:[%s238 + $0x4c8] sm:$0xff]
        %v440 = vld [vmem:[%s248 + $0x3] sm:$0x1]
        %v441 = vperm.slane %v440, 0
        %442 = vmatpush.msra.mxu0 %v439
        %443 = vmatpush.msra.mxu0 %v438
        %444 = vmatpush.msra.mxu0 %v437
        %445 = vmatpush.msra.mxu0 %v436
        %446 = vmatpush.msra.mxu0 %v435
        %447 = vmatpush.msra.mxu0 %v434
        %448 = vmatpush.msra.mxu0 %v433
        %449 = vmatpush.msra.mxu0 %v432
        %450 = vmatpush.msra.mxu0 %v431
        %451 = vmatpush.msra.mxu0 %v430
        %452 = vmatpush.msra.mxu0 %v429
        %453 = vmatpush.msra.mxu0 %v428
        %454 = vmatpush.msra.mxu0 %v427
        %455 = vmatpush.msra.mxu0 %v426
        %456 = vmatpush.msra.mxu0 %v425
        %457 = vmatpush.msra.mxu0 %v424
        %458 = vmatmul.f32.gmra.mxu0 %v410
        %v459 = vpop.f32.mrf.mxu0
        %v460 = vadd.f32 %v441, %v459
        %461 = vmatmul.f32.gmra.mxu0 %v411
        %v462 = vpop.f32.mrf.mxu0
        %v463 = vadd.f32 %v441, %v462
        %464 = vdwg.mxu0
        %v465 = vld [vmem:[%s238 + $0x20] sm:$0xff]
        %v466 = vld [vmem:[%s238 + $0x70] sm:$0xff]
        %v467 = vld [vmem:[%s238 + $0xc0] sm:$0xff]
        %v468 = vld [vmem:[%s238 + $0x110] sm:$0xff]
        %v469 = vld [vmem:[%s238 + $0x160] sm:$0xff]
        %v470 = vld [vmem:[%s238 + $0x1b0] sm:$0xff]
        %v471 = vld [vmem:[%s238 + $0x200] sm:$0xff]
        %v472 = vld [vmem:[%s238 + $0x250] sm:$0xff]
        %v473 = vld [vmem:[%s238 + $0x2a0] sm:$0xff]
        %v474 = vld [vmem:[%s238 + $0x2f0] sm:$0xff]
        %v475 = vld [vmem:[%s238 + $0x340] sm:$0xff]
        %v476 = vld [vmem:[%s238 + $0x390] sm:$0xff]
        %v477 = vld [vmem:[%s238 + $0x3e0] sm:$0xff]
        %v478 = vld [vmem:[%s238 + $0x430] sm:$0xff]
        %v479 = vld [vmem:[%s238 + $0x480] sm:$0xff]
        %v480 = vld [vmem:[%s238 + $0x4d0] sm:$0xff]
        %v481 = vld [vmem:[%s248 + $0x4] sm:$0x1]
        %v482 = vperm.slane %v481, 0
        %483 = vmatpush.msra.mxu0 %v480
        %484 = vmatpush.msra.mxu0 %v479
        %485 = vmatpush.msra.mxu0 %v478
        %486 = vmatpush.msra.mxu0 %v477
        %487 = vmatpush.msra.mxu0 %v476
        %488 = vmatpush.msra.mxu0 %v475
        %489 = vmatpush.msra.mxu0 %v474
        %490 = vmatpush.msra.mxu0 %v473
        %491 = vmatpush.msra.mxu0 %v472
        %492 = vmatpush.msra.mxu0 %v471
        %493 = vmatpush.msra.mxu0 %v470
        %494 = vmatpush.msra.mxu0 %v469
        %495 = vmatpush.msra.mxu0 %v468
        %496 = vmatpush.msra.mxu0 %v467
        %497 = vmatpush.msra.mxu0 %v466
        %498 = vmatpush.msra.mxu0 %v465
        %499 = vmatmul.f32.gmra.mxu0 %v416
        %v500 = vpop.f32.mrf.mxu0
        %v501 = vadd.f32 %v482, %v500
        %502 = vmatmul.f32.gmra.mxu0 %v417
        %v503 = vpop.f32.mrf.mxu0
        %v504 = vadd.f32 %v482, %v503
        %505 = vdwg.mxu0
        %v506 = vld [vmem:[%s238 + $0x28] sm:$0xff]
        %v507 = vld [vmem:[%s238 + $0x78] sm:$0xff]
        %v508 = vld [vmem:[%s238 + $0xc8] sm:$0xff]
        %v509 = vld [vmem:[%s238 + $0x118] sm:$0xff]
        %v510 = vld [vmem:[%s238 + $0x168] sm:$0xff]
        %v511 = vld [vmem:[%s238 + $0x1b8] sm:$0xff]
        %v512 = vld [vmem:[%s238 + $0x208] sm:$0xff]
        %v513 = vld [vmem:[%s238 + $0x258] sm:$0xff]
        %v514 = vld [vmem:[%s238 + $0x2a8] sm:$0xff]
        %v515 = vld [vmem:[%s238 + $0x2f8] sm:$0xff]
        %v516 = vld [vmem:[%s238 + $0x348] sm:$0xff]
        %v517 = vld [vmem:[%s238 + $0x398] sm:$0xff]
        %v518 = vld [vmem:[%s238 + $0x3e8] sm:$0xff]
        %v519 = vld [vmem:[%s238 + $0x438] sm:$0xff]
        %v520 = vld [vmem:[%s238 + $0x488] sm:$0xff]
        %v521 = vld [vmem:[%s238 + $0x4d8] sm:$0xff]
        %v522 = vld [vmem:[%s248 + $0x5] sm:$0x1]
        %v523 = vperm.slane %v522, 0
        %524 = vmatpush.msra.mxu0 %v521
        %525 = vmatpush.msra.mxu0 %v520
        %526 = vmatpush.msra.mxu0 %v519
        %527 = vmatpush.msra.mxu0 %v518
        %528 = vmatpush.msra.mxu0 %v517
        %529 = vmatpush.msra.mxu0 %v516
        %530 = vmatpush.msra.mxu0 %v515
        %531 = vmatpush.msra.mxu0 %v514
        %532 = vmatpush.msra.mxu0 %v513
        %533 = vmatpush.msra.mxu0 %v512
        %534 = vmatpush.msra.mxu0 %v511
        %535 = vmatpush.msra.mxu0 %v510
        %536 = vmatpush.msra.mxu0 %v509
        %537 = vmatpush.msra.mxu0 %v508
        %538 = vmatpush.msra.mxu0 %v507
        %539 = vmatpush.msra.mxu0 %v506
        %540 = vmatmul.f32.gmra.mxu0 %v422
        %v541 = vpop.f32.mrf.mxu0
        %v542 = vadd.f32 %v523, %v541
        %543 = vmatmul.f32.gmra.mxu0 %v423
        %v544 = vpop.f32.mrf.mxu0
        %v545 = vadd.f32 %v523, %v544
        %546 = vdwg.mxu0
        %v547 = vlaneseq
        %v548 = vand.u32 %v547, 127
        %vm549 = vcmp.ge.s32.totalorder %v548, 0
        %vm550 = vcmp.lt.s32.totalorder %v548, 32
        %vm551 = vmand %vm549, %vm550
        %v552 = vsel %vm551, 1, 0
        %v553 = vcvt.s32.f32 %v552
        %v554 = vmul.f32 %v460, %v553
        %v555 = vmul.f32 %v463, %v553
        %v556 = vmul.f32 %v542, %v553
        %v557 = vmul.f32 %v545, %v553
        %vm558 = vcmp.ge.s32.totalorder %v548, 32
        %vm559 = vcmp.lt.s32.totalorder %v548, 64
        %vm560 = vmand %vm558, %vm559
        %v561 = vsel %vm560, 1, 0
        %v562 = vcvt.s32.f32 %v561
        %v563 = vmul.f32 %v460, %v562
        %v564 = vmul.f32 %v463, %v562
        %v565 = vmul.f32 %v542, %v562
        %v566 = vmul.f32 %v545, %v562
        %vm567 = vcmp.ge.s32.totalorder %v548, 64
        %vm568 = vcmp.lt.s32.totalorder %v548, 96
        %vm569 = vmand %vm567, %vm568
        %v570 = vsel %vm569, 1, 0
        %v571 = vcvt.s32.f32 %v570
        %v572 = vmul.f32 %v460, %v571
        %v573 = vmul.f32 %v463, %v571
        %v574 = vmul.f32 %v542, %v571
        %v575 = vmul.f32 %v545, %v571
        %vm576 = vcmp.ge.s32.totalorder %v548, 96
        %vm577 = vcmp.lt.s32.totalorder %v548, 128
        %vm578 = vmand %vm576, %vm577
        %v579 = vsel %vm578, 1, 0
        %v580 = vcvt.s32.f32 %v579
        %v581 = vmul.f32 %v460, %v580
        %v582 = vmul.f32 %v463, %v580
        %v583 = vmul.f32 %v542, %v580
        %v584 = vmul.f32 %v545, %v580
        %585 = vmatpush.xpose.msra.mxu0 0.0
        %586 = vmatpush.xpose.msra.mxu0 0.0
        %587 = vmatpush.xpose.msra.mxu0 0.0
        %588 = vmatpush.xpose.msra.mxu0 0.0
        %589 = vmatpush.xpose.msra.mxu0 0.0
        %590 = vmatpush.xpose.msra.mxu0 0.0
        %591 = vmatpush.xpose.msra.mxu0 0.0
        %592 = vmatpush.xpose.msra.mxu0 0.0
        %593 = vmatpush.xpose.msra.mxu0 0.0
        %594 = vmatpush.xpose.msra.mxu0 0.0
        %595 = vmatpush.xpose.msra.mxu0 0.0
        %596 = vmatpush.xpose.msra.mxu0 0.0
        %597 = vmatpush.xpose.msra.mxu0 0.0
        %598 = vmatpush.xpose.msra.mxu0 0.0
        %599 = vmatpush.xpose.msra.mxu0 0.0
        %600 = vmatpush.xpose.msra.mxu0 %v501
        %601 = vmatmul.f32.gmra.mxu0 %v554
        %v602 = vpop.f32.mrf.mxu0
        %v603 = vadd.f32 0.0, %v602
        %604 = vdwg.mxu0
        %605 = vmatpush.xpose.msra.mxu0 0.0
        %606 = vmatpush.xpose.msra.mxu0 0.0
        %607 = vmatpush.xpose.msra.mxu0 0.0
        %608 = vmatpush.xpose.msra.mxu0 0.0
        %609 = vmatpush.xpose.msra.mxu0 0.0
        %610 = vmatpush.xpose.msra.mxu0 0.0
        %611 = vmatpush.xpose.msra.mxu0 0.0
        %612 = vmatpush.xpose.msra.mxu0 0.0
        %613 = vmatpush.xpose.msra.mxu0 0.0
        %614 = vmatpush.xpose.msra.mxu0 0.0
        %615 = vmatpush.xpose.msra.mxu0 0.0
        %616 = vmatpush.xpose.msra.mxu0 0.0
        %617 = vmatpush.xpose.msra.mxu0 0.0
        %618 = vmatpush.xpose.msra.mxu0 0.0
        %619 = vmatpush.xpose.msra.mxu0 0.0
        %620 = vmatpush.xpose.msra.mxu0 %v504
        %621 = vmatmul.f32.gmra.mxu0 %v555
        %v622 = vpop.f32.mrf.mxu0
        %v623 = vadd.f32 0.0, %v622
        %624 = vdwg.mxu0
        %625 = vmatpush.xpose.msra.mxu0 0.0
        %626 = vmatpush.xpose.msra.mxu0 0.0
        %627 = vmatpush.xpose.msra.mxu0 0.0
        %628 = vmatpush.xpose.msra.mxu0 0.0
        %629 = vmatpush.xpose.msra.mxu0 0.0
        %630 = vmatpush.xpose.msra.mxu0 0.0
        %631 = vmatpush.xpose.msra.mxu0 0.0
        %632 = vmatpush.xpose.msra.mxu0 0.0
        %633 = vmatpush.xpose.msra.mxu0 0.0
        %634 = vmatpush.xpose.msra.mxu0 0.0
        %635 = vmatpush.xpose.msra.mxu0 0.0
        %636 = vmatpush.xpose.msra.mxu0 0.0
        %637 = vmatpush.xpose.msra.mxu0 0.0
        %638 = vmatpush.xpose.msra.mxu0 0.0
        %639 = vmatpush.xpose.msra.mxu0 0.0
        %640 = vmatpush.xpose.msra.mxu0 %v501
        %641 = vmatmul.f32.gmra.mxu0 %v563
        %v642 = vpop.f32.mrf.mxu0
        %v643 = vadd.f32 0.0, %v642
        %644 = vdwg.mxu0
        %645 = vmatpush.xpose.msra.mxu0 0.0
        %646 = vmatpush.xpose.msra.mxu0 0.0
        %647 = vmatpush.xpose.msra.mxu0 0.0
        %648 = vmatpush.xpose.msra.mxu0 0.0
        %649 = vmatpush.xpose.msra.mxu0 0.0
        %650 = vmatpush.xpose.msra.mxu0 0.0
        %651 = vmatpush.xpose.msra.mxu0 0.0
        %652 = vmatpush.xpose.msra.mxu0 0.0
        %653 = vmatpush.xpose.msra.mxu0 0.0
        %654 = vmatpush.xpose.msra.mxu0 0.0
        %655 = vmatpush.xpose.msra.mxu0 0.0
        %656 = vmatpush.xpose.msra.mxu0 0.0
        %657 = vmatpush.xpose.msra.mxu0 0.0
        %658 = vmatpush.xpose.msra.mxu0 0.0
        %659 = vmatpush.xpose.msra.mxu0 0.0
        %660 = vmatpush.xpose.msra.mxu0 %v504
        %661 = vmatmul.f32.gmra.mxu0 %v564
        %v662 = vpop.f32.mrf.mxu0
        %v663 = vadd.f32 0.0, %v662
        %664 = vdwg.mxu0
        %665 = vmatpush.xpose.msra.mxu0 0.0
        %666 = vmatpush.xpose.msra.mxu0 0.0
        %667 = vmatpush.xpose.msra.mxu0 0.0
        %668 = vmatpush.xpose.msra.mxu0 0.0
        %669 = vmatpush.xpose.msra.mxu0 0.0
        %670 = vmatpush.xpose.msra.mxu0 0.0
        %671 = vmatpush.xpose.msra.mxu0 0.0
        %672 = vmatpush.xpose.msra.mxu0 0.0
        %673 = vmatpush.xpose.msra.mxu0 0.0
        %674 = vmatpush.xpose.msra.mxu0 0.0
        %675 = vmatpush.xpose.msra.mxu0 0.0
        %676 = vmatpush.xpose.msra.mxu0 0.0
        %677 = vmatpush.xpose.msra.mxu0 0.0
        %678 = vmatpush.xpose.msra.mxu0 0.0
        %679 = vmatpush.xpose.msra.mxu0 0.0
        %680 = vmatpush.xpose.msra.mxu0 %v501
        %681 = vmatmul.f32.gmra.mxu0 %v572
        %v682 = vpop.f32.mrf.mxu0
        %v683 = vadd.f32 0.0, %v682
        %684 = vdwg.mxu0
        %685 = vmatpush.xpose.msra.mxu0 0.0
        %686 = vmatpush.xpose.msra.mxu0 0.0
        %687 = vmatpush.xpose.msra.mxu0 0.0
        %688 = vmatpush.xpose.msra.mxu0 0.0
        %689 = vmatpush.xpose.msra.mxu0 0.0
        %690 = vmatpush.xpose.msra.mxu0 0.0
        %691 = vmatpush.xpose.msra.mxu0 0.0
        %692 = vmatpush.xpose.msra.mxu0 0.0
        %693 = vmatpush.xpose.msra.mxu0 0.0
        %694 = vmatpush.xpose.msra.mxu0 0.0
        %695 = vmatpush.xpose.msra.mxu0 0.0
        %696 = vmatpush.xpose.msra.mxu0 0.0
        %697 = vmatpush.xpose.msra.mxu0 0.0
        %698 = vmatpush.xpose.msra.mxu0 0.0
        %699 = vmatpush.xpose.msra.mxu0 0.0
        %700 = vmatpush.xpose.msra.mxu0 %v504
        %701 = vmatmul.f32.gmra.mxu0 %v573
        %v702 = vpop.f32.mrf.mxu0
        %v703 = vadd.f32 0.0, %v702
        %704 = vdwg.mxu0
        %705 = vmatpush.xpose.msra.mxu0 0.0
        %706 = vmatpush.xpose.msra.mxu0 0.0
        %707 = vmatpush.xpose.msra.mxu0 0.0
        %708 = vmatpush.xpose.msra.mxu0 0.0
        %709 = vmatpush.xpose.msra.mxu0 0.0
        %710 = vmatpush.xpose.msra.mxu0 0.0
        %711 = vmatpush.xpose.msra.mxu0 0.0
        %712 = vmatpush.xpose.msra.mxu0 0.0
        %713 = vmatpush.xpose.msra.mxu0 0.0
        %714 = vmatpush.xpose.msra.mxu0 0.0
        %715 = vmatpush.xpose.msra.mxu0 0.0
        %716 = vmatpush.xpose.msra.mxu0 0.0
        %717 = vmatpush.xpose.msra.mxu0 0.0
        %718 = vmatpush.xpose.msra.mxu0 0.0
        %719 = vmatpush.xpose.msra.mxu0 0.0
        %720 = vmatpush.xpose.msra.mxu0 %v501
        %721 = vmatmul.f32.gmra.mxu0 %v581
        %v722 = vpop.f32.mrf.mxu0
        %v723 = vadd.f32 0.0, %v722
        %724 = vdwg.mxu0
        %725 = vmatpush.xpose.msra.mxu0 0.0
        %726 = vmatpush.xpose.msra.mxu0 0.0
        %727 = vmatpush.xpose.msra.mxu0 0.0
        %728 = vmatpush.xpose.msra.mxu0 0.0
        %729 = vmatpush.xpose.msra.mxu0 0.0
        %730 = vmatpush.xpose.msra.mxu0 0.0
        %731 = vmatpush.xpose.msra.mxu0 0.0
        %732 = vmatpush.xpose.msra.mxu0 0.0
        %733 = vmatpush.xpose.msra.mxu0 0.0
        %734 = vmatpush.xpose.msra.mxu0 0.0
        %735 = vmatpush.xpose.msra.mxu0 0.0
        %736 = vmatpush.xpose.msra.mxu0 0.0
        %737 = vmatpush.xpose.msra.mxu0 0.0
        %738 = vmatpush.xpose.msra.mxu0 0.0
        %739 = vmatpush.xpose.msra.mxu0 0.0
        %740 = vmatpush.xpose.msra.mxu0 %v504
        %741 = vmatmul.f32.gmra.mxu0 %v582
        %v742 = vpop.f32.mrf.mxu0
        %v743 = vadd.f32 0.0, %v742
        %744 = vdwg.mxu0
        %v745 = vmul.f32 %v603, 0.088388346
        %v746 = vmul.f32 %v623, 0.088388346
        %v747 = vmul.f32 %v643, 0.088388346
        %v748 = vmul.f32 %v663, 0.088388346
        %v749 = vmul.f32 %v683, 0.088388346
        %v750 = vmul.f32 %v703, 0.088388346
        %v751 = vmul.f32 %v723, 0.088388346
        %v752 = vmul.f32 %v743, 0.088388346
        %vm753 = vcmask 64512
        %v754 = vsel %vm753, %v745, -inf
        %755 = vmax.xlane.f32.xlu0 %v754
        %v756 = vpop.xlane.xlu0 %755
        %v757 = vsel %vm753, %v746, -inf
        %758 = vmax.xlane.f32.xlu0 %v757
        %v759 = vpop.xlane.xlu0 %758
        %v760 = vsel %vm753, %v747, -inf
        %761 = vmax.xlane.f32.xlu0 %v760
        %v762 = vpop.xlane.xlu0 %761
        %v763 = vsel %vm753, %v748, -inf
        %764 = vmax.xlane.f32.xlu0 %v763
        %v765 = vpop.xlane.xlu0 %764
        %v766 = vsel %vm753, %v749, -inf
        %767 = vmax.xlane.f32.xlu0 %v766
        %v768 = vpop.xlane.xlu0 %767
        %v769 = vsel %vm753, %v750, -inf
        %770 = vmax.xlane.f32.xlu0 %v769
        %v771 = vpop.xlane.xlu0 %770
        %v772 = vsel %vm753, %v751, -inf
        %773 = vmax.xlane.f32.xlu0 %v772
        %v774 = vpop.xlane.xlu0 %773
        %v775 = vsel %vm753, %v752, -inf
        %776 = vmax.xlane.f32.xlu0 %v775
        %v777 = vpop.xlane.xlu0 %776
        %v778 = vsub.f32 %v745, %v756
        %v779 = vsub.f32 %v746, %v759
        %v780 = vsub.f32 %v747, %v762
        %v781 = vsub.f32 %v748, %v765
        %v782 = vsub.f32 %v749, %v768
        %v783 = vsub.f32 %v750, %v771
        %v784 = vsub.f32 %v751, %v774
        %v785 = vsub.f32 %v752, %v777
        %v786 = vmul.f32 %v778, 1.442695
        %v787 = vpow.pop %v786
        %v788 = vmul.f32 %v779, 1.442695
        %v789 = vpow.pop %v788
        %v790 = vmul.f32 %v780, 1.442695
        %v791 = vpow.pop %v790
        %v792 = vmul.f32 %v781, 1.442695
        %v793 = vpow.pop %v792
        %v794 = vmul.f32 %v782, 1.442695
        %v795 = vpow.pop %v794
        %v796 = vmul.f32 %v783, 1.442695
        %v797 = vpow.pop %v796
        %v798 = vmul.f32 %v784, 1.442695
        %v799 = vpow.pop %v798
        %v800 = vmul.f32 %v785, 1.442695
        %v801 = vpow.pop %v800
        %v802 = vsel %vm753, %v787, 0.0
        %803 = vadd.xlane.f32.xlu0 %v802
        %v804 = vpop.xlane.xlu0 %803
        %v805 = vsel %vm753, %v789, 0.0
        %806 = vadd.xlane.f32.xlu0 %v805
        %v807 = vpop.xlane.xlu0 %806
        %v808 = vsel %vm753, %v791, 0.0
        %809 = vadd.xlane.f32.xlu0 %v808
        %v810 = vpop.xlane.xlu0 %809
        %v811 = vsel %vm753, %v793, 0.0
        %812 = vadd.xlane.f32.xlu0 %v811
        %v813 = vpop.xlane.xlu0 %812
        %v814 = vsel %vm753, %v795, 0.0
        %815 = vadd.xlane.f32.xlu0 %v814
        %v816 = vpop.xlane.xlu0 %815
        %v817 = vsel %vm753, %v797, 0.0
        %818 = vadd.xlane.f32.xlu0 %v817
        %v819 = vpop.xlane.xlu0 %818
        %v820 = vsel %vm753, %v799, 0.0
        %821 = vadd.xlane.f32.xlu0 %v820
        %v822 = vpop.xlane.xlu0 %821
        %v823 = vsel %vm753, %v801, 0.0
        %824 = vadd.xlane.f32.xlu0 %v823
        %v825 = vpop.xlane.xlu0 %824
        %v826 = vrcp.pop %v804
        %v827 = vrcp.pop %v807
        %v828 = vrcp.pop %v810
        %v829 = vrcp.pop %v813
        %v830 = vrcp.pop %v816
        %v831 = vrcp.pop %v819
        %v832 = vrcp.pop %v822
        %v833 = vrcp.pop %v825
        %v834 = vmul.f32 %v787, %v826
        %v835 = vmul.f32 %v789, %v827
        %v836 = vmul.f32 %v791, %v828
        %v837 = vmul.f32 %v793, %v829
        %v838 = vmul.f32 %v795, %v830
        %v839 = vmul.f32 %v797, %v831
        %v840 = vmul.f32 %v799, %v832
        %v841 = vmul.f32 %v801, %v833
        %v843 = vsel %vm753, %v834, 0
        %845 = vmatpush.msra.mxu0 0.0
        %846 = vmatpush.msra.mxu0 0.0
        %847 = vmatpush.msra.mxu0 0.0
        %848 = vmatpush.msra.mxu0 0.0
        %849 = vmatpush.msra.mxu0 0.0
        %850 = vmatpush.msra.mxu0 0.0
        %851 = vmatpush.msra.mxu0 0.0
        %852 = vmatpush.msra.mxu0 0.0
        %853 = vmatpush.msra.mxu0 0.0
        %854 = vmatpush.msra.mxu0 0.0
        %855 = vmatpush.msra.mxu0 0.0
        %856 = vmatpush.msra.mxu0 0.0
        %857 = vmatpush.msra.mxu0 0.0
        %858 = vmatpush.msra.mxu0 0.0
        %859 = vmatpush.msra.mxu0 0.0
        %860 = vmatpush.msra.mxu0 %v556
        %861 = vmatmul.f32.gmra.mxu0 %v843
        %v862 = vpop.f32.mrf.mxu0
        %v863 = vadd.f32 0.0, %v862
        %864 = vdwg.mxu0
        %v866 = vsel %vm753, %v835, 0
        %868 = vmatpush.msra.mxu0 0.0
        %869 = vmatpush.msra.mxu0 0.0
        %870 = vmatpush.msra.mxu0 0.0
        %871 = vmatpush.msra.mxu0 0.0
        %872 = vmatpush.msra.mxu0 0.0
        %873 = vmatpush.msra.mxu0 0.0
        %874 = vmatpush.msra.mxu0 0.0
        %875 = vmatpush.msra.mxu0 0.0
        %876 = vmatpush.msra.mxu0 0.0
        %877 = vmatpush.msra.mxu0 0.0
        %878 = vmatpush.msra.mxu0 0.0
        %879 = vmatpush.msra.mxu0 0.0
        %880 = vmatpush.msra.mxu0 0.0
        %881 = vmatpush.msra.mxu0 0.0
        %882 = vmatpush.msra.mxu0 0.0
        %883 = vmatpush.msra.mxu0 %v557
        %884 = vmatmul.f32.gmra.mxu0 %v866
        %v885 = vpop.f32.mrf.mxu0
        %v886 = vadd.f32 0.0, %v885
        %887 = vdwg.mxu0
        %v889 = vsel %vm753, %v836, 0
        %891 = vmatpush.msra.mxu0 0.0
        %892 = vmatpush.msra.mxu0 0.0
        %893 = vmatpush.msra.mxu0 0.0
        %894 = vmatpush.msra.mxu0 0.0
        %895 = vmatpush.msra.mxu0 0.0
        %896 = vmatpush.msra.mxu0 0.0
        %897 = vmatpush.msra.mxu0 0.0
        %898 = vmatpush.msra.mxu0 0.0
        %899 = vmatpush.msra.mxu0 0.0
        %900 = vmatpush.msra.mxu0 0.0
        %901 = vmatpush.msra.mxu0 0.0
        %902 = vmatpush.msra.mxu0 0.0
        %903 = vmatpush.msra.mxu0 0.0
        %904 = vmatpush.msra.mxu0 0.0
        %905 = vmatpush.msra.mxu0 0.0
        %906 = vmatpush.msra.mxu0 %v565
        %907 = vmatmul.f32.gmra.mxu0 %v889
        %v908 = vpop.f32.mrf.mxu0
        %v909 = vadd.f32 0.0, %v908
        %910 = vdwg.mxu0
        %v912 = vsel %vm753, %v837, 0
        %914 = vmatpush.msra.mxu0 0.0
        %915 = vmatpush.msra.mxu0 0.0
        %916 = vmatpush.msra.mxu0 0.0
        %917 = vmatpush.msra.mxu0 0.0
        %918 = vmatpush.msra.mxu0 0.0
        %919 = vmatpush.msra.mxu0 0.0
        %920 = vmatpush.msra.mxu0 0.0
        %921 = vmatpush.msra.mxu0 0.0
        %922 = vmatpush.msra.mxu0 0.0
        %923 = vmatpush.msra.mxu0 0.0
        %924 = vmatpush.msra.mxu0 0.0
        %925 = vmatpush.msra.mxu0 0.0
        %926 = vmatpush.msra.mxu0 0.0
        %927 = vmatpush.msra.mxu0 0.0
        %928 = vmatpush.msra.mxu0 0.0
        %929 = vmatpush.msra.mxu0 %v566
        %930 = vmatmul.f32.gmra.mxu0 %v912
        %v931 = vpop.f32.mrf.mxu0
        %v932 = vadd.f32 0.0, %v931
        %933 = vdwg.mxu0
        %v935 = vsel %vm753, %v838, 0
        %937 = vmatpush.msra.mxu0 0.0
        %938 = vmatpush.msra.mxu0 0.0
        %939 = vmatpush.msra.mxu0 0.0
        %940 = vmatpush.msra.mxu0 0.0
        %941 = vmatpush.msra.mxu0 0.0
        %942 = vmatpush.msra.mxu0 0.0
        %943 = vmatpush.msra.mxu0 0.0
        %944 = vmatpush.msra.mxu0 0.0
        %945 = vmatpush.msra.mxu0 0.0
        %946 = vmatpush.msra.mxu0 0.0
        %947 = vmatpush.msra.mxu0 0.0
        %948 = vmatpush.msra.mxu0 0.0
        %949 = vmatpush.msra.mxu0 0.0
        %950 = vmatpush.msra.mxu0 0.0
        %951 = vmatpush.msra.mxu0 0.0
        %952 = vmatpush.msra.mxu0 %v574
        %953 = vmatmul.f32.gmra.mxu0 %v935
        %v954 = vpop.f32.mrf.mxu0
        %v955 = vadd.f32 0.0, %v954
        %956 = vdwg.mxu0
        %v958 = vsel %vm753, %v839, 0
        %960 = vmatpush.msra.mxu0 0.0
        %961 = vmatpush.msra.mxu0 0.0
        %962 = vmatpush.msra.mxu0 0.0
        %963 = vmatpush.msra.mxu0 0.0
        %964 = vmatpush.msra.mxu0 0.0
        %965 = vmatpush.msra.mxu0 0.0
        %966 = vmatpush.msra.mxu0 0.0
        %967 = vmatpush.msra.mxu0 0.0
        %968 = vmatpush.msra.mxu0 0.0
        %969 = vmatpush.msra.mxu0 0.0
        %970 = vmatpush.msra.mxu0 0.0
        %971 = vmatpush.msra.mxu0 0.0
        %972 = vmatpush.msra.mxu0 0.0
        %973 = vmatpush.msra.mxu0 0.0
        %974 = vmatpush.msra.mxu0 0.0
        %975 = vmatpush.msra.mxu0 %v575
        %976 = vmatmul.f32.gmra.mxu0 %v958
        %v977 = vpop.f32.mrf.mxu0
        %v978 = vadd.f32 0.0, %v977
        %979 = vdwg.mxu0
        %v981 = vsel %vm753, %v840, 0
        %983 = vmatpush.msra.mxu0 0.0
        %984 = vmatpush.msra.mxu0 0.0
        %985 = vmatpush.msra.mxu0 0.0
        %986 = vmatpush.msra.mxu0 0.0
        %987 = vmatpush.msra.mxu0 0.0
        %988 = vmatpush.msra.mxu0 0.0
        %989 = vmatpush.msra.mxu0 0.0
        %990 = vmatpush.msra.mxu0 0.0
        %991 = vmatpush.msra.mxu0 0.0
        %992 = vmatpush.msra.mxu0 0.0
        %993 = vmatpush.msra.mxu0 0.0
        %994 = vmatpush.msra.mxu0 0.0
        %995 = vmatpush.msra.mxu0 0.0
        %996 = vmatpush.msra.mxu0 0.0
        %997 = vmatpush.msra.mxu0 0.0
        %998 = vmatpush.msra.mxu0 %v583
        %999 = vmatmul.f32.gmra.mxu0 %v981
        %v1000 = vpop.f32.mrf.mxu0
        %v1001 = vadd.f32 0.0, %v1000
        %1002 = vdwg.mxu0
        %v1004 = vsel %vm753, %v841, 0
        %1006 = vmatpush.msra.mxu0 0.0
        %1007 = vmatpush.msra.mxu0 0.0
        %1008 = vmatpush.msra.mxu0 0.0
        %1009 = vmatpush.msra.mxu0 0.0
        %1010 = vmatpush.msra.mxu0 0.0
        %1011 = vmatpush.msra.mxu0 0.0
        %1012 = vmatpush.msra.mxu0 0.0
        %1013 = vmatpush.msra.mxu0 0.0
        %1014 = vmatpush.msra.mxu0 0.0
        %1015 = vmatpush.msra.mxu0 0.0
        %1016 = vmatpush.msra.mxu0 0.0
        %1017 = vmatpush.msra.mxu0 0.0
        %1018 = vmatpush.msra.mxu0 0.0
        %1019 = vmatpush.msra.mxu0 0.0
        %1020 = vmatpush.msra.mxu0 0.0
        %1021 = vmatpush.msra.mxu0 %v584
        %1022 = vmatmul.f32.gmra.mxu0 %v1004
        %v1023 = vpop.f32.mrf.mxu0
        %v1024 = vadd.f32 0.0, %v1023
        %1025 = vdwg.mxu0
        %v1026 = vadd.f32 %v863, %v909
        %v1027 = vadd.f32 %v886, %v932
        %v1028 = vadd.f32 %v1026, %v955
        %v1029 = vadd.f32 %v1027, %v978
        %v1030 = vadd.f32 %v1028, %v1001
        %v1031 = vadd.f32 %v1029, %v1024
        %v1032 = vadd.f32 %v1030, %v460
        %v1033 = vadd.f32 %v1031, %v463
        %v1034 = vld [vmem:[%s248 + $0x9] sm:$0x1]
        %v1035 = vld [vmem:[%s248 + $0xa] sm:$0x1]
        %1036 = vadd.xlane.f32.xlu0 %v1032
        %v1037 = vpop.xlane.xlu0 %1036
        %1038 = vadd.xlane.f32.xlu0 %v1033
        %v1039 = vpop.xlane.xlu0 %1038
        %v1040 = vrcp.pop 128.0
        %v1041 = vmul.f32 128.0, %v1040
        %v1042 = vsub.f32 1.0, %v1041
        %v1043 = vmul.f32 %v1040, %v1042
        %v1044 = vadd.f32 %v1040, %v1043
        %vm1045 = vweird.f32 %v1040
        %v1046 = vsel %vm1045, %v1040, %v1044
        %v1047 = vmul.f32 %v1037, %v1046
        %v1048 = vmul.f32 %v1039, %v1046
        %v1049 = vsub.f32 %v1032, %v1047
        %v1050 = vsub.f32 %v1033, %v1048
        %v1051 = vmul.f32 %v1049, %v1049
        %v1052 = vmul.f32 %v1050, %v1050
        %1053 = vadd.xlane.f32.xlu0 %v1051
        %v1054 = vpop.xlane.xlu0 %1053
        %1055 = vadd.xlane.f32.xlu0 %v1052
        %v1056 = vpop.xlane.xlu0 %1055
        %v1057 = vmul.f32 %v1054, %v1046
        %v1058 = vmul.f32 %v1056, %v1046
        %v1059 = vadd.f32 %v1057, 1e-05
        %v1060 = vadd.f32 %v1058, 1e-05
        %v1061 = vrsqrt.pop %v1059
        %v1062 = vmul.f32 %v1061, %v1059
        %v1063 = vmul.f32 %v1062, %v1061
        %v1064 = vmul.f32 0.5, %v1063
        %v1065 = vsub.f32 1.5, %v1064
        %v1066 = vmul.f32 %v1061, %v1065
        %vm1067 = vweird.f32 %v1059
        %vm1068 = vweird.f32 %v1061
        %vm1069 = vmor %vm1067, %vm1068
        %v1070 = vsel %vm1069, %v1061, %v1066
        %v1071 = vrsqrt.pop %v1060
        %v1072 = vmul.f32 %v1071, %v1060
        %v1073 = vmul.f32 %v1072, %v1071
        %v1074 = vmul.f32 0.5, %v1073
        %v1075 = vsub.f32 1.5, %v1074
        %v1076 = vmul.f32 %v1071, %v1075
        %vm1077 = vweird.f32 %v1060
        %vm1078 = vweird.f32 %v1071
        %vm1079 = vmor %vm1077, %vm1078
        %v1080 = vsel %vm1079, %v1071, %v1076
        %v1081 = vmul.f32 %v1049, %v1070
        %v1082 = vmul.f32 %v1050, %v1080
        %v1083 = vperm.slane %v1034, 0
        %v1084 = vmul.f32 %v1081, %v1083
        %v1085 = vmul.f32 %v1082, %v1083
        %v1086 = vperm.slane %v1035, 0
        %v1087 = vadd.f32 %v1084, %v1086
        %v1088 = vadd.f32 %v1085, %v1086
        %v1089 = vld [vmem:[%s238 + $0x30] sm:$0xff]
        %v1090 = vld [vmem:[%s238 + $0x38] sm:$0xff]
        %v1091 = vld [vmem:[%s238 + $0x80] sm:$0xff]
        %v1092 = vld [vmem:[%s238 + $0x88] sm:$0xff]
        %v1093 = vld [vmem:[%s238 + $0xd0] sm:$0xff]
        %v1094 = vld [vmem:[%s238 + $0xd8] sm:$0xff]
        %v1095 = vld [vmem:[%s238 + $0x120] sm:$0xff]
        %v1096 = vld [vmem:[%s238 + $0x128] sm:$0xff]
        %v1097 = vld [vmem:[%s238 + $0x170] sm:$0xff]
        %v1098 = vld [vmem:[%s238 + $0x178] sm:$0xff]
        %v1099 = vld [vmem:[%s238 + $0x1c0] sm:$0xff]
        %v1100 = vld [vmem:[%s238 + $0x1c8] sm:$0xff]
        %v1101 = vld [vmem:[%s238 + $0x210] sm:$0xff]
        %v1102 = vld [vmem:[%s238 + $0x218] sm:$0xff]
        %v1103 = vld [vmem:[%s238 + $0x260] sm:$0xff]
        %v1104 = vld [vmem:[%s238 + $0x268] sm:$0xff]
        %v1105 = vld [vmem:[%s238 + $0x2b0] sm:$0xff]
        %v1106 = vld [vmem:[%s238 + $0x2b8] sm:$0xff]
        %v1107 = vld [vmem:[%s238 + $0x300] sm:$0xff]
        %v1108 = vld [vmem:[%s238 + $0x308] sm:$0xff]
        %v1109 = vld [vmem:[%s238 + $0x350] sm:$0xff]
        %v1110 = vld [vmem:[%s238 + $0x358] sm:$0xff]
        %v1111 = vld [vmem:[%s238 + $0x3a0] sm:$0xff]
        %v1112 = vld [vmem:[%s238 + $0x3a8] sm:$0xff]
        %v1113 = vld [vmem:[%s238 + $0x3f0] sm:$0xff]
        %v1114 = vld [vmem:[%s238 + $0x3f8] sm:$0xff]
        %v1115 = vld [vmem:[%s238 + $0x440] sm:$0xff]
        %v1116 = vld [vmem:[%s238 + $0x448] sm:$0xff]
        %v1117 = vld [vmem:[%s238 + $0x490] sm:$0xff]
        %v1118 = vld [vmem:[%s238 + $0x498] sm:$0xff]
        %v1119 = vld [vmem:[%s238 + $0x4e0] sm:$0xff]
        %v1120 = vld [vmem:[%s238 + $0x4e8] sm:$0xff]
        %1121 = vmatpush.msra.mxu0 %v1119
        %1122 = vmatpush.msra.mxu0 %v1117
        %1123 = vmatpush.msra.mxu0 %v1115
        %1124 = vmatpush.msra.mxu0 %v1113
        %1125 = vmatpush.msra.mxu0 %v1111
        %1126 = vmatpush.msra.mxu0 %v1109
        %1127 = vmatpush.msra.mxu0 %v1107
        %1128 = vmatpush.msra.mxu0 %v1105
        %1129 = vmatpush.msra.mxu0 %v1103
        %1130 = vmatpush.msra.mxu0 %v1101
        %1131 = vmatpush.msra.mxu0 %v1099
        %1132 = vmatpush.msra.mxu0 %v1097
        %1133 = vmatpush.msra.mxu0 %v1095
        %1134 = vmatpush.msra.mxu0 %v1093
        %1135 = vmatpush.msra.mxu0 %v1091
        %1136 = vmatpush.msra.mxu0 %v1089
        %1137 = vmatmul.f32.gmra.mxu0 %v1087
        %v1138 = vpop.f32.mrf.mxu0
        %v1139 = vadd.f32 0.0, %v1138
        %1140 = vmatmul.f32.gmra.mxu0 %v1088
        %v1141 = vpop.f32.mrf.mxu0
        %v1142 = vadd.f32 0.0, %v1141
        %1143 = vdwg.mxu0
        %1144 = vmatpush.msra.mxu0 %v1120
        %1145 = vmatpush.msra.mxu0 %v1118
        %1146 = vmatpush.msra.mxu0 %v1116
        %1147 = vmatpush.msra.mxu0 %v1114
        %1148 = vmatpush.msra.mxu0 %v1112
        %1149 = vmatpush.msra.mxu0 %v1110
        %1150 = vmatpush.msra.mxu0 %v1108
        %1151 = vmatpush.msra.mxu0 %v1106
        %1152 = vmatpush.msra.mxu0 %v1104
        %1153 = vmatpush.msra.mxu0 %v1102
        %1154 = vmatpush.msra.mxu0 %v1100
        %1155 = vmatpush.msra.mxu0 %v1098
        %1156 = vmatpush.msra.mxu0 %v1096
        %1157 = vmatpush.msra.mxu0 %v1094
        %1158 = vmatpush.msra.mxu0 %v1092
        %1159 = vmatpush.msra.mxu0 %v1090
        %1160 = vmatmul.f32.gmra.mxu0 %v1087
        %v1161 = vpop.f32.mrf.mxu0
        %v1162 = vadd.f32 0.0, %v1161
        %1163 = vmatmul.f32.gmra.mxu0 %v1088
        %v1164 = vpop.f32.mrf.mxu0
        %v1165 = vadd.f32 0.0, %v1164
        %1166 = vdwg.mxu0
        %v1167 = vld [vmem:[%s248 + $0x6] sm:$0x1]
        %v1168 = vperm.slane %v1167, 0
        %v1169 = vadd.f32 %v1139, %v1168
        %v1170 = vadd.f32 %v1142, %v1168
        %v1171 = vmax.f32 %v1169, 0.0
        %v1172 = vmax.f32 %v1170, 0.0
        %v1173 = vld [vmem:[%s248 + $0x7] sm:$0x1]
        %v1174 = vperm.slane %v1173, 0
        %v1175 = vadd.f32 %v1162, %v1174
        %v1176 = vadd.f32 %v1165, %v1174
        %v1177 = vmax.f32 %v1175, 0.0
        %v1178 = vmax.f32 %v1176, 0.0
        %v1179 = vld [vmem:[%s238 + $0x40] sm:$0xff]
        %v1180 = vld [vmem:[%s238 + $0x90] sm:$0xff]
        %v1181 = vld [vmem:[%s238 + $0xe0] sm:$0xff]
        %v1182 = vld [vmem:[%s238 + $0x130] sm:$0xff]
        %v1183 = vld [vmem:[%s238 + $0x180] sm:$0xff]
        %v1184 = vld [vmem:[%s238 + $0x1d0] sm:$0xff]
        %v1185 = vld [vmem:[%s238 + $0x220] sm:$0xff]
        %v1186 = vld [vmem:[%s238 + $0x270] sm:$0xff]
        %v1187 = vld [vmem:[%s238 + $0x2c0] sm:$0xff]
        %v1188 = vld [vmem:[%s238 + $0x310] sm:$0xff]
        %v1189 = vld [vmem:[%s238 + $0x360] sm:$0xff]
        %v1190 = vld [vmem:[%s238 + $0x3b0] sm:$0xff]
        %v1191 = vld [vmem:[%s238 + $0x400] sm:$0xff]
        %v1192 = vld [vmem:[%s238 + $0x450] sm:$0xff]
        %v1193 = vld [vmem:[%s238 + $0x4a0] sm:$0xff]
        %v1194 = vld [vmem:[%s238 + $0x4f0] sm:$0xff]
        %v1195 = vld [vmem:[%s238 + $0x48] sm:$0xff]
        %v1196 = vld [vmem:[%s238 + $0x98] sm:$0xff]
        %v1197 = vld [vmem:[%s238 + $0xe8] sm:$0xff]
        %v1198 = vld [vmem:[%s238 + $0x138] sm:$0xff]
        %v1199 = vld [vmem:[%s238 + $0x188] sm:$0xff]
        %v1200 = vld [vmem:[%s238 + $0x1d8] sm:$0xff]
        %v1201 = vld [vmem:[%s238 + $0x228] sm:$0xff]
        %v1202 = vld [vmem:[%s238 + $0x278] sm:$0xff]
        %v1203 = vld [vmem:[%s238 + $0x2c8] sm:$0xff]
        %v1204 = vld [vmem:[%s238 + $0x318] sm:$0xff]
        %v1205 = vld [vmem:[%s238 + $0x368] sm:$0xff]
        %v1206 = vld [vmem:[%s238 + $0x3b8] sm:$0xff]
        %v1207 = vld [vmem:[%s238 + $0x408] sm:$0xff]
        %v1208 = vld [vmem:[%s238 + $0x458] sm:$0xff]
        %v1209 = vld [vmem:[%s238 + $0x4a8] sm:$0xff]
        %v1210 = vld [vmem:[%s238 + $0x4f8] sm:$0xff]
        %1211 = vmatpush.msra.mxu0 %v1210
        %1212 = vmatpush.msra.mxu0 %v1209
        %1213 = vmatpush.msra.mxu0 %v1208
        %1214 = vmatpush.msra.mxu0 %v1207
        %1215 = vmatpush.msra.mxu0 %v1206
        %1216 = vmatpush.msra.mxu0 %v1205
        %1217 = vmatpush.msra.mxu0 %v1204
        %1218 = vmatpush.msra.mxu0 %v1203
        %1219 = vmatpush.msra.mxu0 %v1202
        %1220 = vmatpush.msra.mxu0 %v1201
        %1221 = vmatpush.msra.mxu0 %v1200
        %1222 = vmatpush.msra.mxu0 %v1199
        %1223 = vmatpush.msra.mxu0 %v1198
        %1224 = vmatpush.msra.mxu0 %v1197
        %1225 = vmatpush.msra.mxu0 %v1196
        %1226 = vmatpush.msra.mxu0 %v1195
        %1227 = vmatmul.f32.gmra.mxu0 %v1177
        %v1228 = vpop.f32.mrf.mxu0
        %v1229 = vadd.f32 0.0, %v1228
        %1230 = vmatmul.f32.gmra.mxu0 %v1178
        %v1231 = vpop.f32.mrf.mxu0
        %v1232 = vadd.f32 0.0, %v1231
        %1233 = vdwg.mxu0
        %1234 = vmatpush.msra.mxu0 %v1194
        %1235 = vmatpush.msra.mxu0 %v1193
        %1236 = vmatpush.msra.mxu0 %v1192
        %1237 = vmatpush.msra.mxu0 %v1191
        %1238 = vmatpush.msra.mxu0 %v1190
        %1239 = vmatpush.msra.mxu0 %v1189
        %1240 = vmatpush.msra.mxu0 %v1188
        %1241 = vmatpush.msra.mxu0 %v1187
        %1242 = vmatpush.msra.mxu0 %v1186
        %1243 = vmatpush.msra.mxu0 %v1185
        %1244 = vmatpush.msra.mxu0 %v1184
        %1245 = vmatpush.msra.mxu0 %v1183
        %1246 = vmatpush.msra.mxu0 %v1182
        %1247 = vmatpush.msra.mxu0 %v1181
        %1248 = vmatpush.msra.mxu0 %v1180
        %1249 = vmatpush.msra.mxu0 %v1179
        %1250 = vmatmul.f32.gmra.mxu0 %v1171
        %v1251 = vpop.f32.mrf.mxu0
        %v1252 = vadd.f32 %v1229, %v1251
        %1253 = vmatmul.f32.gmra.mxu0 %v1172
        %v1254 = vpop.f32.mrf.mxu0
        %v1255 = vadd.f32 %v1232, %v1254
        %1256 = vdwg.mxu0
        %v1257 = vld [vmem:[%s248 + $0x8] sm:$0x1]
        %v1258 = vperm.slane %v1257, 0
        %v1259 = vadd.f32 %v1252, %v1258
        %v1260 = vadd.f32 %v1255, %v1258
        %v1261 = vadd.f32 %v1087, %v1259
        %v1262 = vadd.f32 %v1088, %v1260
        %v1263 = vld [vmem:[%s248 + $0xb] sm:$0x1]
        %v1264 = vld [vmem:[%s248 + $0xc] sm:$0x1]
        %1265 = vadd.xlane.f32.xlu0 %v1261
        %v1266 = vpop.xlane.xlu0 %1265
        %1267 = vadd.xlane.f32.xlu0 %v1262
        %v1268 = vpop.xlane.xlu0 %1267
        %v1269 = vmul.f32 %v1266, %v1046
        %v1270 = vmul.f32 %v1268, %v1046
        %v1271 = vsub.f32 %v1261, %v1269
        %v1272 = vsub.f32 %v1262, %v1270
        %v1273 = vmul.f32 %v1271, %v1271
        %v1274 = vmul.f32 %v1272, %v1272
        %1275 = vadd.xlane.f32.xlu0 %v1273
        %v1276 = vpop.xlane.xlu0 %1275
        %1277 = vadd.xlane.f32.xlu0 %v1274
        %v1278 = vpop.xlane.xlu0 %1277
        %v1279 = vmul.f32 %v1276, %v1046
        %v1280 = vmul.f32 %v1278, %v1046
        %v1281 = vadd.f32 %v1279, 1e-05
        %v1282 = vadd.f32 %v1280, 1e-05
        %v1283 = vrsqrt.pop %v1281
        %v1284 = vmul.f32 %v1283, %v1281
        %v1285 = vmul.f32 %v1284, %v1283
        %v1286 = vmul.f32 0.5, %v1285
        %v1287 = vsub.f32 1.5, %v1286
        %v1288 = vmul.f32 %v1283, %v1287
        %vm1289 = vweird.f32 %v1281
        %vm1290 = vweird.f32 %v1283
        %vm1291 = vmor %vm1289, %vm1290
        %v1292 = vsel %vm1291, %v1283, %v1288
        %v1293 = vrsqrt.pop %v1282
        %v1294 = vmul.f32 %v1293, %v1282
        %v1295 = vmul.f32 %v1294, %v1293
        %v1296 = vmul.f32 0.5, %v1295
        %v1297 = vsub.f32 1.5, %v1296
        %v1298 = vmul.f32 %v1293, %v1297
        %vm1299 = vweird.f32 %v1282
        %vm1300 = vweird.f32 %v1293
        %vm1301 = vmor %vm1299, %vm1300
        %v1302 = vsel %vm1301, %v1293, %v1298
        %v1303 = vmul.f32 %v1271, %v1292
        %v1304 = vmul.f32 %v1272, %v1302
        %v1305 = vperm.slane %v1263, 0
        %v1306 = vmul.f32 %v1303, %v1305
        %v1307 = vmul.f32 %v1304, %v1305
        %v1308 = vperm.slane %v1264, 0
        %v1309 = vadd.f32 %v1306, %v1308
        %v1310 = vadd.f32 %v1307, %v1308
        %1311 = vst [vmem:[#allocation2] sm:$0xff] %v1309
        %1312 = vst [vmem:[#allocation2 + $0x8] sm:$0xff] %v1310
        %p1313 = scmp.eq.s32.totalorder %s21, 1
        // Predicated region
        $region57: #{tpu_custom_call.1} parent=35 // pred_check
          %p1314 = pneg %p1313
        $region58: #{tpu_custom_call.1} parent=35 // pred_check_branch
          %1316 = sbr.rel (%p1314) target = $region60
        $region59: #{tpu_custom_call.1} parent=35 // pred_region
          %v1317 = vld [vmem:[#allocation9] sm:$0xff]
          %v1318 = vld [vmem:[#allocation9 + $0x8] sm:$0xff]
          %v1319 = vld [vmem:[#allocation9 + $0x10] sm:$0xff]
          %v1320 = vld [vmem:[#allocation9 + $0x18] sm:$0xff]
          %v1321 = vld [vmem:[#allocation9 + $0x20] sm:$0xff]
          %v1322 = vld [vmem:[#allocation9 + $0x28] sm:$0xff]
          %v1323 = vld [vmem:[#allocation9 + $0x30] sm:$0xff]
          %v1324 = vld [vmem:[#allocation9 + $0x38] sm:$0xff]
          %v1325 = vld [vmem:[#allocation9 + $0x40] sm:$0xff]
          %v1326 = vld [vmem:[#allocation9 + $0x48] sm:$0xff]
          %v1327 = vld [vmem:[#allocation9 + $0x50] sm:$0xff]
          %v1328 = vld [vmem:[#allocation9 + $0x58] sm:$0xff]
          %v1329 = vld [vmem:[#allocation9 + $0x60] sm:$0xff]
          %v1330 = vld [vmem:[#allocation9 + $0x68] sm:$0xff]
          %v1331 = vld [vmem:[#allocation9 + $0x70] sm:$0xff]
          %v1332 = vld [vmem:[#allocation9 + $0x78] sm:$0xff]
          %v1333 = vld [vmem:[#allocation9 + $0x80] sm:$0x1]
          %v1334 = vld [vmem:[#allocation9 + $0x81] sm:$0x1]
          %v1335 = vperm.slane %v1333, 0
          %1336 = vmatpush.msra.mxu0 %v1332
          %1337 = vmatpush.msra.mxu0 %v1331
          %1338 = vmatpush.msra.mxu0 %v1330
          %1339 = vmatpush.msra.mxu0 %v1329
          %1340 = vmatpush.msra.mxu0 %v1328
          %1341 = vmatpush.msra.mxu0 %v1327
          %1342 = vmatpush.msra.mxu0 %v1326
          %1343 = vmatpush.msra.mxu0 %v1325
          %1344 = vmatpush.msra.mxu0 %v1324
          %1345 = vmatpush.msra.mxu0 %v1323
          %1346 = vmatpush.msra.mxu0 %v1322
          %1347 = vmatpush.msra.mxu0 %v1321
          %1348 = vmatpush.msra.mxu0 %v1320
          %1349 = vmatpush.msra.mxu0 %v1319
          %1350 = vmatpush.msra.mxu0 %v1318
          %1351 = vmatpush.msra.mxu0 %v1317
          %1352 = vmatmul.f32.gmra.mxu0 %v1309
          %v1353 = vpop.f32.mrf.mxu0
          %v1354 = vadd.f32 %v1335, %v1353
          %1355 = vmatmul.f32.gmra.mxu0 %v1310
          %v1356 = vpop.f32.mrf.mxu0
          %v1357 = vadd.f32 %v1335, %v1356
          %1358 = vdwg.mxu0
          %v1359 = vmax.f32 %v1354, 0.0
          %v1360 = vmax.f32 %v1357, 0.0
          %v1361 = vperm.slane %v1334, 0
          %v1362 = vmul.f32 %v1359, %v1361
          %v1363 = vmul.f32 %v1360, %v1361
          %1364 = vadd.xlane.f32.xlu0 %v1362
          %v1365 = vpop.xlane.xlu0 %1364
          %1366 = vadd.xlane.f32.xlu0 %v1363
          %v1367 = vpop.xlane.xlu0 %1366
          %vm1368 = vcmp.ge.s32.totalorder %v548, 6
          %v1371 = vperm.slane %v1365, %v548
          %v1372 = vperm.slane %v1367, %v548
          %vm1373 = vcmask 1041409
          %v1374 = vsel %vm1373, %v1372, %v1371
          %v1376 = vsel %vm1368, -1e+20, %v1374
          %vm1377 = vcmask 58368
          %v1378 = vsel %vm1377, %v1376, -inf
          %1379 = vmax.xlane.f32.xlu0 %v1378
          %v1380 = vpop.xlane.xlu0 %1379
          %v1381 = vsub.f32 %v1376, %v1380
          %v1382 = vmul.f32 %v1381, 1.442695
          %v1383 = vpow.pop %v1382
          %v1384 = vsel %vm1377, %v1383, 0.0
          %1385 = vadd.xlane.f32.xlu0 %v1384
          %v1386 = vpop.xlane.xlu0 %1385
          %v1387 = vrcp.pop %v1386
          %v1388 = vmul.f32 %v1383, %v1387
          %1389 = vst.msk [vmem:[#allocation11] sm:$0x3] %vm1377, %v1388
        $region60: #{tpu_custom_call.1} parent=35 // pred_fallthru
          _
        // Predicated region
        $region61: #{tpu_custom_call.1} parent=35 // pred_check
          %p1390 = pneg %p128
        $region62: #{tpu_custom_call.1} parent=35 // pred_check_branch
          %1392 = sbr.rel (%p1390) target = $region64
        $region63: #{tpu_custom_call.1} parent=35 // pred_region
          %1394 = vsyncadd [#allocation5], 0
          %s1396 = sshll.u32 [#allocation11], 4
          %s1397 = int_to_ptr.vmem [resolvable:$true] %s1396
          %s1398 = sshll.u32 %s4, 4
          %s1399 = int_to_ptr.hbm [resolvable:$true] %s1398
          %1401 = dma.vmem_to_hbm [thread:$0]  %s1397, 32, %s1399, [#allocation5]
        $region64: #{tpu_custom_call.1} parent=35 // pred_fallthru
          _
        // Predicated region
        $region65: #{tpu_custom_call.1} parent=35 // pred_check
          %p1402 = pneg %p128
        $region66: #{tpu_custom_call.1} parent=35 // pred_check_branch
          %1404 = sbr.rel (%p1402) target = $region68
        $region67: #{tpu_custom_call.1} parent=35 // pred_region
          %1406 = dma.done [#allocation5], 32
        $region68: #{tpu_custom_call.1} parent=35 // pred_fallthru
          _
      $region36: #{tpu_custom_call.1} parent=5 // pred_fallthru
        _
      %p1407 = scmp.le.s32.totalorder 2, %s16
      // Predicated region
      $region69: #{tpu_custom_call.1} parent=5 // pred_check
        %p1408 = pneg %p1407
      $region70: #{tpu_custom_call.1} parent=5 // pred_check_branch
        %1410 = sbr.rel (%p1408) target = $region72
      $region71: #{tpu_custom_call.1} parent=5 // pred_region
        %s1411 = ssub.s32 %s16, 2
      $region72: #{tpu_custom_call.1} parent=5 // pred_fallthru
        _
    $region6: #{tpu_custom_call.1} parent=1 // loop_footer
      %s20 = sadd.s32 1, %s16
    $region7: #{tpu_custom_call.1} parent=1 // loop_footer_branch
      %15 = sbr.rel target = $region3
    $region8: #{tpu_custom_call.1} parent=1 // loop_exit
      _
    %1412 = vsyncpa [#allocation4], 1
    %s1413 = scalar_lea.sflag [#allocation4], 1
    %1414 = vsyncpa %s1413, 1
    %1415 = vsyncpa [#allocation7], 1
    %s1416 = scalar_lea.sflag [#allocation7], 1
    %1417 = vsyncpa %s1416, 1
    %1418 = vsyncpa [#allocation10], 1
    %1419 = vsyncpa [#allocation5], 1
    %s1420 = scalar_lea.sflag [#allocation5], 1
    %1421 = vsyncpa %s1420, 1

</llo_original>
